<compile_context>
chip_gen: v6e
topology: v6e:2x2x1
jax: 0.10.0
libtpu: 0.0.40
codegen_flags: <defaults>
</compile_context>

<pallas_src>
import functools

import jax
import jax.numpy as jnp
from jax.experimental import pallas as pl
from jax.experimental.pallas import tpu as pltpu

LANE = 128  # vreg lane width


def _round_up(v, m):
    return (v + m - 1) // m * m


def _pad2(a, rows, cols):
    r, c = a.shape
    if r == rows and c == cols:
        return a
    return jnp.pad(a, ((0, rows - r), (0, cols - c)))


# ------------------- fully fused whole-forward kernel (small graphs) ----------------

def _fused_forward_kernel(a_ref, x_ref, w_ref, o_ref, *, num_layers):
    """All layers in one kernel. a/x/w/o are whole-array VMEM blocks, f32."""
    a = a_ref[...]
    h = x_ref[...]
    for l in range(num_layers):                     # unrolled at trace time
        xw = jnp.dot(h, w_ref[l], preferred_element_type=jnp.float32)
        h = jnp.dot(a, xw, preferred_element_type=jnp.float32)
        if l < num_layers - 1:
            h = jnp.maximum(h, 0.0)
    o_ref[...] = h


def _fused_vmem_bytes(n, dims):
    c_pad = max(_round_up(d, LANE) for d in dims)
    n_pad = _round_up(n, LANE)
    num_w = len(dims) - 1
    # A + W stack + x + out + ~2 live intermediates, all f32.
    return 4 * (n_pad * n_pad + num_w * c_pad * c_pad + 4 * n_pad * c_pad)


def gcn_forward_fused(x, a_hat, weights):
    n = x.shape[0]
    num_layers = len(weights)
    out_channels = weights[-1].shape[1]
    dims = [x.shape[1]] + [w.shape[1] for w in weights]
    c_pad = max(_round_up(d, LANE) for d in dims)
    n_pad = _round_up(n, LANE)

    a_p = _pad2(a_hat.astype(jnp.float32), n_pad, n_pad)
    x_p = _pad2(x.astype(jnp.float32), n_pad, c_pad)
    w_stack = jnp.stack(
        [_pad2(w.astype(jnp.float32), c_pad, c_pad) for w in weights])

    flops = num_layers * (2 * n_pad * n_pad * c_pad + 2 * n_pad * c_pad * c_pad)
    bytes_accessed = 4 * (a_p.size + x_p.size + w_stack.size + n_pad * c_pad)

    out = pl.pallas_call(
        functools.partial(_fused_forward_kernel, num_layers=num_layers),
        out_shape=jax.ShapeDtypeStruct((n_pad, c_pad), jnp.float32),
        cost_estimate=pl.CostEstimate(flops=flops, transcendentals=0,
                                      bytes_accessed=bytes_accessed),
    )(a_p, x_p, w_stack)
    return out[:n, :out_channels]


# -------- per-layer tiled kernel: out = relu((A_hat @ X) @ W), fused epilogue -------

def _layer_kernel(a_ref, x_ref, w_ref, o_ref, acc_ref, *,
                  apply_relu, tk, feat_resident):
    k = pl.program_id(1)

    @pl.when(k == 0)
    def _():
        acc_ref[...] = jnp.zeros_like(acc_ref)

    if feat_resident:
        # Whole feature matrix is VMEM-resident (constant block index):
        # slice the k-th contraction chunk in-kernel.
        start = pl.multiple_of(k * tk, tk)
        x_blk = x_ref[pl.ds(start, tk), :]
    else:
        x_blk = x_ref[...]

    acc_ref[...] += jnp.dot(a_ref[...], x_blk.astype(jnp.float32),
                            preferred_element_type=jnp.float32)

    @pl.when(k == pl.num_programs(1) - 1)
    def _():
        # Fused projection epilogue: (A @ X) @ W, W resident in VMEM.
        out = jnp.dot(acc_ref[...], w_ref[...],
                      preferred_element_type=jnp.float32)
        if apply_relu:
            out = jnp.maximum(out, 0.0)
        o_ref[...] = out.astype(o_ref.dtype)


def gcn_layer_tiled(a_hat, feat, w, *, apply_relu, out_dtype, tm, tk,
                    feat_resident):
    n, n2 = a_hat.shape
    n3, c_in = feat.shape
    c_in2, c_out = w.shape
    assert n == n2 == n3 and c_in == c_in2
    assert n % tm == 0 and n % tk == 0

    if feat_resident:
        feat_spec = pl.BlockSpec((n, c_in), lambda i, k: (0, 0))
    else:
        feat_spec = pl.BlockSpec((tk, c_in), lambda i, k: (k, 0))

    flops = 2 * n * n * c_in + 2 * n * c_in * c_out
    bytes_accessed = (a_hat.size * a_hat.dtype.itemsize
                      + feat.size * feat.dtype.itemsize
                      + w.size * w.dtype.itemsize
                      + n * c_out * jnp.dtype(out_dtype).itemsize)

    return pl.pallas_call(
        functools.partial(_layer_kernel, apply_relu=apply_relu, tk=tk,
                          feat_resident=feat_resident),
        out_shape=jax.ShapeDtypeStruct((n, c_out), out_dtype),
        grid_spec=pltpu.PrefetchScalarGridSpec(
            num_scalar_prefetch=0,
            grid=(n // tm, n // tk),
            in_specs=[
                pl.BlockSpec((tm, tk), lambda i, k: (i, k)),      # A_hat tile (f32)
                feat_spec,                                        # features
                pl.BlockSpec((c_in, c_out), lambda i, k: (0, 0)), # W resident
            ],
            out_specs=pl.BlockSpec((tm, c_out), lambda i, k: (i, 0)),
            scratch_shapes=[pltpu.VMEM((tm, c_in), jnp.float32)],
        ),
        compiler_params=pltpu.CompilerParams(
            dimension_semantics=("parallel", "arbitrary")),
        cost_estimate=pl.CostEstimate(flops=flops, transcendentals=0,
                                      bytes_accessed=bytes_accessed),
    )(a_hat, feat, w)


def gcn_forward_tiled(x, a_hat, weights, *, tm=256, tk=256,
                      feat_dtype=jnp.bfloat16, force_streamed_feat=False):
    """General (large-graph) path: one fused pallas_call per layer."""
    n = x.shape[0]
    out_channels = weights[-1].shape[1]
    n_pad = _round_up(n, max(tm, tk))

    # A_hat stays f32 (its quantization is the dominant error term); feature
    # maps travel in bf16; all accumulation is f32.
    a_p = _pad2(a_hat.astype(jnp.float32), n_pad, n_pad)
    h = _pad2(x, n_pad, _round_up(x.shape[1], LANE)).astype(feat_dtype)

    num_layers = len(weights)
    for li, w in enumerate(weights):
        is_last = li == num_layers - 1
        c_in_pad = _round_up(w.shape[0], LANE)
        c_out_pad = _round_up(w.shape[1], LANE)
        w_p = _pad2(w.astype(jnp.float32), c_in_pad, c_out_pad)
        assert h.shape == (n_pad, c_in_pad), (h.shape, (n_pad, c_in_pad))

        # Keep the full feature matrix VMEM-resident when its (double-buffered)
        # footprint fits a conservative budget; otherwise stream (tk, c) tiles.
        feat_bytes = 2 * h.size * h.dtype.itemsize
        feat_resident = (not force_streamed_feat) and feat_bytes <= (6 << 20)

        h = gcn_layer_tiled(
            a_p, h, w_p,
            apply_relu=not is_last,
            out_dtype=jnp.float32 if is_last else feat_dtype,
            tm=tm, tk=tk, feat_resident=feat_resident)
    return h[:n, :out_channels]


# ---------------------------------- dispatcher --------------------------------------

def gcn_forward(x, a_hat, weights, *, tm=256, tk=256, force_tiled=False,
                force_streamed_feat=False):
    """Full GCN forward (eval path). Returns f32 [N, out_channels]."""
    dims = [x.shape[1]] + [w.shape[1] for w in weights]
    if (not force_tiled) and _fused_vmem_bytes(x.shape[0], dims) <= (10 << 20):
        # Everything fits comfortably in VMEM on every generation (v5e scoped
        # default is 16 MiB): single fused kernel, zero HBM intermediates.
        return gcn_forward_fused(x, a_hat, weights)
    return gcn_forward_tiled(x, a_hat, weights, tm=tm, tk=tk,
                             force_streamed_feat=force_streamed_feat)


# ---------------- plain-JAX glue (parameter setup / gcn_norm / reference) -----------

def gcn_norm_dense(adj, improved=False, add_self_loops=True):
    """Symmetric GCN normalization on a dense adjacency matrix."""
    n = adj.shape[0]
    fill = 2.0 if improved else 1.0
    a = adj
    if add_self_loops:
        a = a + fill * jnp.eye(n, dtype=adj.dtype)
    deg = a.sum(axis=1)
    dinv = jnp.where(deg > 0.0, jax.lax.rsqrt(deg), 0.0)
    return dinv[:, None] * a * dinv[None, :]


def glorot(key, c_in, c_out):
    """PyG 'glorot' init: U(-sqrt(6/(fan_in+fan_out)), +...)."""
    lim = (6.0 / (c_in + c_out)) ** 0.5
    return jax.random.uniform(key, (c_in, c_out), jnp.float32, -lim, lim)


def gcn_reference(x, a_hat, weights):
    h = x
    for w in weights[:-1]:
        h = jnp.maximum(a_hat @ (h @ w), 0.0)
    return a_hat @ (h @ weights[-1])


if __name__ == "__main__":
    # Small but tileable problem: 256 nodes, 8 -> 32 -> 32 -> 16 features.
    N = 256
    in_channels, hidden_channels, out_channels = 8, 32, 16
    num_layers = 3

    key = jax.random.PRNGKey(0)
    k_x, k_adj, *k_w = jax.random.split(key, 2 + num_layers)

    # Node features.
    x = jax.random.normal(k_x, (N, in_channels), jnp.float32)

    # Deterministic symmetric binary adjacency (no self loops; gcn_norm adds them).
    rnd = jax.random.uniform(k_adj, (N, N))
    adj = (rnd < 0.05).astype(jnp.float32)
    adj = jnp.maximum(adj, adj.T)
    adj = adj * (1.0 - jnp.eye(N, dtype=jnp.float32))
    a_hat = gcn_norm_dense(adj)

    # Layer weights (Linear(bias=False), glorot init), stored as [C_in, C_out].
    dims = [in_channels] + [hidden_channels] * (num_layers - 1) + [out_channels]
    weights = [glorot(k_w[i], dims[i], dims[i + 1]) for i in range(num_layers)]

    ref = gcn_reference(x, a_hat, weights)
    ref_scale = float(jnp.max(jnp.abs(ref)))

    # 1) Default path at this scale: single fused VMEM-resident kernel (all f32).
    out = jax.block_until_ready(gcn_forward(x, a_hat, weights))
    assert out.shape == (N, out_channels), out.shape
    assert bool(jnp.all(jnp.isfinite(out)))
    err = float(jnp.max(jnp.abs(out - ref)))
    assert err < 0.02 + 0.02 * ref_scale, ("fused", err)

    # 2) Tiled large-graph path (fused projection epilogue, resident feats),
    #    forced here for coverage with a (2, 2) grid.
    out_t = jax.block_until_ready(
        gcn_forward(x, a_hat, weights, force_tiled=True, tm=128, tk=128))
    assert out_t.shape == (N, out_channels), out_t.shape
    err_t = float(jnp.max(jnp.abs(out_t - ref)))
    assert err_t < 0.1 + 0.05 * ref_scale, ("tiled-resident", err_t)

    # 3) Tiled path with streamed feature tiles (fallback for huge graphs).
    out_s = jax.block_until_ready(
        gcn_forward(x, a_hat, weights, force_tiled=True, tm=128, tk=128,
                    force_streamed_feat=True))
    err_s = float(jnp.max(jnp.abs(out_s - ref)))
    assert err_s < 0.1 + 0.05 * ref_scale, ("tiled-streamed", err_s)

    print("KERNEL_OK")
</pallas_src>

<mosaic_0001>
module attributes {stable_mosaic.version = 11 : i64} {
  func.func @_fused_forward_kernel(%arg0: memref<256x256xf32, #tpu.memory_space<vmem>>, %arg1: memref<256x128xf32, #tpu.memory_space<vmem>>, %arg2: memref<3x128x128xf32, #tpu.memory_space<vmem>>, %arg3: memref<256x128xf32, #tpu.memory_space<vmem>>) attributes {dimension_semantics = [], scalar_prefetch = 0 : i64, scratch_operands = 0 : i64, tpu.core_type = #tpu.core_type<tc>} {
    %c0 = arith.constant 0 : index
    %c0_0 = arith.constant 0 : index
    %0 = vector.load %arg0[%c0, %c0_0] : memref<256x256xf32, #tpu.memory_space<vmem>>, vector<256x256xf32>
    %c0_1 = arith.constant 0 : index
    %c0_2 = arith.constant 0 : index
    %1 = vector.load %arg1[%c0_1, %c0_2] : memref<256x128xf32, #tpu.memory_space<vmem>>, vector<256x128xf32>
    %c0_3 = arith.constant 0 : index
    %c0_4 = arith.constant 0 : index
    %c0_5 = arith.constant 0 : index
    %2 = vector.load %arg2[%c0_3, %c0_4, %c0_5] : memref<3x128x128xf32, #tpu.memory_space<vmem>>, vector<1x128x128xf32>
    %3 = vector.shape_cast %2 : vector<1x128x128xf32> to vector<128x128xf32>
    %cst = arith.constant dense<0.000000e+00> : vector<256x128xf32>
    %4 = tpu.matmul %1, %3, %cst {dimension_numbers = #tpu.dot_dimension_numbers<[1], [0], [0], [1], [0, 0, 1, 1], [], []>} : vector<256x128xf32>, vector<128x128xf32>, vector<256x128xf32> -> vector<256x128xf32>
    %cst_6 = arith.constant dense<0.000000e+00> : vector<256x128xf32>
    %5 = tpu.matmul %0, %4, %cst_6 {dimension_numbers = #tpu.dot_dimension_numbers<[1], [0], [0], [1], [0, 0, 1, 1], [], []>} : vector<256x256xf32>, vector<256x128xf32>, vector<256x128xf32> -> vector<256x128xf32>
    %cst_7 = arith.constant 0.000000e+00 : f32
    %6 = vector.broadcast %cst_7 : f32 to vector<256x128xf32>
    %7 = arith.maximumf %5, %6 : vector<256x128xf32>
    %c1 = arith.constant 1 : index
    %c0_8 = arith.constant 0 : index
    %c0_9 = arith.constant 0 : index
    %8 = vector.load %arg2[%c1, %c0_8, %c0_9] : memref<3x128x128xf32, #tpu.memory_space<vmem>>, vector<1x128x128xf32>
    %9 = vector.shape_cast %8 : vector<1x128x128xf32> to vector<128x128xf32>
    %cst_10 = arith.constant dense<0.000000e+00> : vector<256x128xf32>
    %10 = tpu.matmul %7, %9, %cst_10 {dimension_numbers = #tpu.dot_dimension_numbers<[1], [0], [0], [1], [0, 0, 1, 1], [], []>} : vector<256x128xf32>, vector<128x128xf32>, vector<256x128xf32> -> vector<256x128xf32>
    %cst_11 = arith.constant dense<0.000000e+00> : vector<256x128xf32>
    %11 = tpu.matmul %0, %10, %cst_11 {dimension_numbers = #tpu.dot_dimension_numbers<[1], [0], [0], [1], [0, 0, 1, 1], [], []>} : vector<256x256xf32>, vector<256x128xf32>, vector<256x128xf32> -> vector<256x128xf32>
    %cst_12 = arith.constant 0.000000e+00 : f32
    %12 = vector.broadcast %cst_12 : f32 to vector<256x128xf32>
    %13 = arith.maximumf %11, %12 : vector<256x128xf32>
    %c2 = arith.constant 2 : index
    %c0_13 = arith.constant 0 : index
    %c0_14 = arith.constant 0 : index
    %14 = vector.load %arg2[%c2, %c0_13, %c0_14] : memref<3x128x128xf32, #tpu.memory_space<vmem>>, vector<1x128x128xf32>
    %15 = vector.shape_cast %14 : vector<1x128x128xf32> to vector<128x128xf32>
    %cst_15 = arith.constant dense<0.000000e+00> : vector<256x128xf32>
    %16 = tpu.matmul %13, %15, %cst_15 {dimension_numbers = #tpu.dot_dimension_numbers<[1], [0], [0], [1], [0, 0, 1, 1], [], []>} : vector<256x128xf32>, vector<128x128xf32>, vector<256x128xf32> -> vector<256x128xf32>
    %cst_16 = arith.constant dense<0.000000e+00> : vector<256x128xf32>
    %17 = tpu.matmul %0, %16, %cst_16 {dimension_numbers = #tpu.dot_dimension_numbers<[1], [0], [0], [1], [0, 0, 1, 1], [], []>} : vector<256x256xf32>, vector<256x128xf32>, vector<256x128xf32> -> vector<256x128xf32>
    %c0_17 = arith.constant 0 : index
    %c0_18 = arith.constant 0 : index
    %18 = vector.load %arg3[%c0_17, %c0_18] : memref<256x128xf32, #tpu.memory_space<vmem>>, vector<256x128xf32>
    tpu.vector_store %arg3[%c0_17, %c0_18], %17 {strides = array<i32>} : memref<256x128xf32, #tpu.memory_space<vmem>>, vector<256x128xf32>,
    return
  }
}

</mosaic_0001>

<llo_original>
// kernel: tpu_custom_call.1
$region0: #{tpu_custom_call.1}
  #allocation0 [shape = 'u32[]', space=smem, size = 0x4, offset = 0x4, fixed_abs, tag = 'smem constant byte address 0x4 - core index']
  #allocation1 [shape = 'u32[144,128]{1,0:T(1,128)}', space=vmem, size = 0x12000, scoped, tag = 'internal scratch']
  %s0 = inlined_call_operand.hbm [shape: f32[256,256], index: 0, kind: input, shape index: {}]
  %s1 = inlined_call_operand.hbm [shape: f32[256,128], index: 1, kind: input, shape index: {}]
  %s2 = inlined_call_operand.hbm [shape: f32[3,128,128], index: 2, kind: input, shape index: {}]
  %s3 = inlined_call_operand.hbm [shape: f32[256,128], index: 3, kind: output, shape index: {}]
  %s4 = sld [smem:[#allocation0]]
  $region34: #{tpu_custom_call.1} parent=0
    _
  %s6 = ssub.s32 1, %s4
  %s7 = scalar_select 0, %s6, %s4
  $region1: #{tpu_custom_call.1} parent=0
    #allocation2 [shape = 'u8[262144]{0}', space=vmem, size = 0x40000, scoped, tag = 'input window, operand 0, single buffered']
    #allocation3 [shape = 's32[1]{0}', space=sflag, size = 0x4, scoped, tag = 'scoped memory for tpu_custom_call.1']
    #allocation4 [shape = 's32[1]{0}', space=sflag, size = 0x4, scoped, tag = 'scoped memory for tpu_custom_call.1']
    #allocation5 [shape = 'u8[131072]{0}', space=vmem, size = 0x20000, scoped, tag = 'input window, operand 1, single buffered']
    #allocation6 [shape = 's32[1]{0}', space=sflag, size = 0x4, scoped, tag = 'scoped memory for tpu_custom_call.1']
    #allocation7 [shape = 'u8[196608]{0}', space=vmem, size = 0x30000, scoped, tag = 'input window, operand 2, single buffered']
    #allocation8 [shape = 'u8[131072]{0}', space=vmem, size = 0x20000, scoped, tag = 'output window, operand 0, single buffered']
    %8 = vsyncpa [#allocation3], 0
    %9 = vsyncpa [#allocation6], 0
    %10 = vsyncpa [#allocation4], 0
    // Predicated region
    $region2: #{tpu_custom_call.1} parent=1 // pred_check
      _
    $region3: #{tpu_custom_call.1} parent=1 // pred_check_branch
      %12 = sbr.rel (0) target = $region5
    $region4: #{tpu_custom_call.1} parent=1 // pred_region
      %s14 = ssub.s32 8192, 8192
      %15 = vsyncadd [#allocation3], %s14
      %s16 = sshll.u32 [#allocation2], 4
      %s17 = int_to_ptr.vmem [resolvable:$true] %s16
      %22 = dma.hbm_to_vmem [thread:$0]  %s0, 8192, %s17, [#allocation3], 256, 256, 16
    $region5: #{tpu_custom_call.1} parent=1 // pred_fallthru
      _
    // Predicated region
    $region6: #{tpu_custom_call.1} parent=1 // pred_check
      _
    $region7: #{tpu_custom_call.1} parent=1 // pred_check_branch
      %24 = sbr.rel (0) target = $region9
    $region8: #{tpu_custom_call.1} parent=1 // pred_region
      %s26 = ssub.s32 4096, 4096
      %27 = vsyncadd [#allocation6], %s26
      %s28 = sshll.u32 [#allocation5], 4
      %s29 = int_to_ptr.vmem [resolvable:$true] %s28
      %34 = dma.hbm_to_vmem [thread:$0]  %s1, 4096, %s29, [#allocation6], 128, 128, 8
    $region9: #{tpu_custom_call.1} parent=1 // pred_fallthru
      _
    // Predicated region
    $region10: #{tpu_custom_call.1} parent=1 // pred_check
      _
    $region11: #{tpu_custom_call.1} parent=1 // pred_check_branch
      %36 = sbr.rel (0) target = $region13
    $region12: #{tpu_custom_call.1} parent=1 // pred_region
      %s38 = ssub.s32 6144, 6144
      %39 = vsyncadd [#allocation6], %s38
      %s40 = sshll.u32 [#allocation7], 4
      %s41 = int_to_ptr.vmem [resolvable:$true] %s40
      %46 = dma.hbm_to_vmem [thread:$0]  %s2, 6144, %s41, [#allocation6], 128, 128, 8
    $region13: #{tpu_custom_call.1} parent=1 // pred_fallthru
      _
    // Predicated region
    $region14: #{tpu_custom_call.1} parent=1 // pred_check
      _
    $region15: #{tpu_custom_call.1} parent=1 // pred_check_branch
      %48 = sbr.rel (0) target = $region17
    $region16: #{tpu_custom_call.1} parent=1 // pred_region
      %49 = dma.done [#allocation3], 8192
    $region17: #{tpu_custom_call.1} parent=1 // pred_fallthru
      _
    // Predicated region
    $region18: #{tpu_custom_call.1} parent=1 // pred_check
      _
    $region19: #{tpu_custom_call.1} parent=1 // pred_check_branch
      %51 = sbr.rel (0) target = $region21
    $region20: #{tpu_custom_call.1} parent=1 // pred_region
      %52 = dma.done [#allocation6], 4096
    $region21: #{tpu_custom_call.1} parent=1 // pred_fallthru
      _
    // Predicated region
    $region22: #{tpu_custom_call.1} parent=1 // pred_check
      _
    $region23: #{tpu_custom_call.1} parent=1 // pred_check_branch
      %54 = sbr.rel (0) target = $region25
    $region24: #{tpu_custom_call.1} parent=1 // pred_region
      %55 = dma.done [#allocation6], 6144
    $region25: #{tpu_custom_call.1} parent=1 // pred_fallthru
      _
    %v56 = vld [vmem:[#allocation2] sm:$0xff]
    %v57 = vld [vmem:[#allocation2 + $0x8] sm:$0xff]
    %v58 = vld [vmem:[#allocation2 + $0x10] sm:$0xff]
    %v59 = vld [vmem:[#allocation2 + $0x18] sm:$0xff]
    %v60 = vld [vmem:[#allocation2 + $0x20] sm:$0xff]
    %v61 = vld [vmem:[#allocation2 + $0x28] sm:$0xff]
    %v62 = vld [vmem:[#allocation2 + $0x30] sm:$0xff]
    %v63 = vld [vmem:[#allocation2 + $0x38] sm:$0xff]
    %v64 = vld [vmem:[#allocation2 + $0x40] sm:$0xff]
    %v65 = vld [vmem:[#allocation2 + $0x48] sm:$0xff]
    %v66 = vld [vmem:[#allocation2 + $0x50] sm:$0xff]
    %v67 = vld [vmem:[#allocation2 + $0x58] sm:$0xff]
    %v68 = vld [vmem:[#allocation2 + $0x60] sm:$0xff]
    %v69 = vld [vmem:[#allocation2 + $0x68] sm:$0xff]
    %v70 = vld [vmem:[#allocation2 + $0x70] sm:$0xff]
    %v71 = vld [vmem:[#allocation2 + $0x78] sm:$0xff]
    %v72 = vld [vmem:[#allocation2 + $0x80] sm:$0xff]
    %v73 = vld [vmem:[#allocation2 + $0x88] sm:$0xff]
    %v74 = vld [vmem:[#allocation2 + $0x90] sm:$0xff]
    %v75 = vld [vmem:[#allocation2 + $0x98] sm:$0xff]
    %v76 = vld [vmem:[#allocation2 + $0xa0] sm:$0xff]
    %v77 = vld [vmem:[#allocation2 + $0xa8] sm:$0xff]
    %v78 = vld [vmem:[#allocation2 + $0xb0] sm:$0xff]
    %v79 = vld [vmem:[#allocation2 + $0xb8] sm:$0xff]
    %v80 = vld [vmem:[#allocation2 + $0xc0] sm:$0xff]
    %v81 = vld [vmem:[#allocation2 + $0xc8] sm:$0xff]
    %v82 = vld [vmem:[#allocation2 + $0xd0] sm:$0xff]
    %v83 = vld [vmem:[#allocation2 + $0xd8] sm:$0xff]
    %v84 = vld [vmem:[#allocation2 + $0xe0] sm:$0xff]
    %v85 = vld [vmem:[#allocation2 + $0xe8] sm:$0xff]
    %v86 = vld [vmem:[#allocation2 + $0xf0] sm:$0xff]
    %v87 = vld [vmem:[#allocation2 + $0xf8] sm:$0xff]
    %v88 = vld [vmem:[#allocation2 + $0x100] sm:$0xff]
    %v89 = vld [vmem:[#allocation2 + $0x108] sm:$0xff]
    %v90 = vld [vmem:[#allocation2 + $0x110] sm:$0xff]
    %v91 = vld [vmem:[#allocation2 + $0x118] sm:$0xff]
    %v92 = vld [vmem:[#allocation2 + $0x120] sm:$0xff]
    %v93 = vld [vmem:[#allocation2 + $0x128] sm:$0xff]
    %v94 = vld [vmem:[#allocation2 + $0x130] sm:$0xff]
    %v95 = vld [vmem:[#allocation2 + $0x138] sm:$0xff]
    %v96 = vld [vmem:[#allocation2 + $0x140] sm:$0xff]
    %v97 = vld [vmem:[#allocation2 + $0x148] sm:$0xff]
    %v98 = vld [vmem:[#allocation2 + $0x150] sm:$0xff]
    %v99 = vld [vmem:[#allocation2 + $0x158] sm:$0xff]
    %v100 = vld [vmem:[#allocation2 + $0x160] sm:$0xff]
    %v101 = vld [vmem:[#allocation2 + $0x168] sm:$0xff]
    %v102 = vld [vmem:[#allocation2 + $0x170] sm:$0xff]
    %v103 = vld [vmem:[#allocation2 + $0x178] sm:$0xff]
    %v104 = vld [vmem:[#allocation2 + $0x180] sm:$0xff]
    %v105 = vld [vmem:[#allocation2 + $0x188] sm:$0xff]
    %v106 = vld [vmem:[#allocation2 + $0x190] sm:$0xff]
    %v107 = vld [vmem:[#allocation2 + $0x198] sm:$0xff]
    %v108 = vld [vmem:[#allocation2 + $0x1a0] sm:$0xff]
    %v109 = vld [vmem:[#allocation2 + $0x1a8] sm:$0xff]
    %v110 = vld [vmem:[#allocation2 + $0x1b0] sm:$0xff]
    %v111 = vld [vmem:[#allocation2 + $0x1b8] sm:$0xff]
    %v112 = vld [vmem:[#allocation2 + $0x1c0] sm:$0xff]
    %v113 = vld [vmem:[#allocation2 + $0x1c8] sm:$0xff]
    %v114 = vld [vmem:[#allocation2 + $0x1d0] sm:$0xff]
    %v115 = vld [vmem:[#allocation2 + $0x1d8] sm:$0xff]
    %v116 = vld [vmem:[#allocation2 + $0x1e0] sm:$0xff]
    %v117 = vld [vmem:[#allocation2 + $0x1e8] sm:$0xff]
    %v118 = vld [vmem:[#allocation2 + $0x1f0] sm:$0xff]
    %v119 = vld [vmem:[#allocation2 + $0x1f8] sm:$0xff]
    %v120 = vld [vmem:[#allocation5] sm:$0xff]
    %v121 = vld [vmem:[#allocation5 + $0x8] sm:$0xff]
    %v122 = vld [vmem:[#allocation5 + $0x10] sm:$0xff]
    %v123 = vld [vmem:[#allocation5 + $0x18] sm:$0xff]
    %v124 = vld [vmem:[#allocation5 + $0x20] sm:$0xff]
    %v125 = vld [vmem:[#allocation5 + $0x28] sm:$0xff]
    %v126 = vld [vmem:[#allocation5 + $0x30] sm:$0xff]
    %v127 = vld [vmem:[#allocation5 + $0x38] sm:$0xff]
    %v128 = vld [vmem:[#allocation5 + $0x40] sm:$0xff]
    %v129 = vld [vmem:[#allocation5 + $0x48] sm:$0xff]
    %v130 = vld [vmem:[#allocation5 + $0x50] sm:$0xff]
    %v131 = vld [vmem:[#allocation5 + $0x58] sm:$0xff]
    %v132 = vld [vmem:[#allocation5 + $0x60] sm:$0xff]
    %v133 = vld [vmem:[#allocation5 + $0x68] sm:$0xff]
    %v134 = vld [vmem:[#allocation5 + $0x70] sm:$0xff]
    %v135 = vld [vmem:[#allocation5 + $0x78] sm:$0xff]
    %v136 = vld [vmem:[#allocation5 + $0x80] sm:$0xff]
    %v137 = vld [vmem:[#allocation5 + $0x88] sm:$0xff]
    %v138 = vld [vmem:[#allocation5 + $0x90] sm:$0xff]
    %v139 = vld [vmem:[#allocation5 + $0x98] sm:$0xff]
    %v140 = vld [vmem:[#allocation5 + $0xa0] sm:$0xff]
    %v141 = vld [vmem:[#allocation5 + $0xa8] sm:$0xff]
    %v142 = vld [vmem:[#allocation5 + $0xb0] sm:$0xff]
    %v143 = vld [vmem:[#allocation5 + $0xb8] sm:$0xff]
    %v144 = vld [vmem:[#allocation5 + $0xc0] sm:$0xff]
    %v145 = vld [vmem:[#allocation5 + $0xc8] sm:$0xff]
    %v146 = vld [vmem:[#allocation5 + $0xd0] sm:$0xff]
    %v147 = vld [vmem:[#allocation5 + $0xd8] sm:$0xff]
    %v148 = vld [vmem:[#allocation5 + $0xe0] sm:$0xff]
    %v149 = vld [vmem:[#allocation5 + $0xe8] sm:$0xff]
    %v150 = vld [vmem:[#allocation5 + $0xf0] sm:$0xff]
    %v151 = vld [vmem:[#allocation5 + $0xf8] sm:$0xff]
    %v152 = vld [vmem:[#allocation7] sm:$0xff]
    %v153 = vld [vmem:[#allocation7 + $0x8] sm:$0xff]
    %v154 = vld [vmem:[#allocation7 + $0x10] sm:$0xff]
    %v155 = vld [vmem:[#allocation7 + $0x18] sm:$0xff]
    %v156 = vld [vmem:[#allocation7 + $0x20] sm:$0xff]
    %v157 = vld [vmem:[#allocation7 + $0x28] sm:$0xff]
    %v158 = vld [vmem:[#allocation7 + $0x30] sm:$0xff]
    %v159 = vld [vmem:[#allocation7 + $0x38] sm:$0xff]
    %v160 = vld [vmem:[#allocation7 + $0x40] sm:$0xff]
    %v161 = vld [vmem:[#allocation7 + $0x48] sm:$0xff]
    %v162 = vld [vmem:[#allocation7 + $0x50] sm:$0xff]
    %v163 = vld [vmem:[#allocation7 + $0x58] sm:$0xff]
    %v164 = vld [vmem:[#allocation7 + $0x60] sm:$0xff]
    %v165 = vld [vmem:[#allocation7 + $0x68] sm:$0xff]
    %v166 = vld [vmem:[#allocation7 + $0x70] sm:$0xff]
    %v167 = vld [vmem:[#allocation7 + $0x78] sm:$0xff]
    %168 = vmatprep.subr.mxu0 0.0
    %169 = vmatpush1.msra.mxu0 %v167
    %170 = vmatprep.subr.mxu0 0.0
    %171 = vmatpush1.msra.mxu0 %v166
    %172 = vmatprep.subr.mxu0 0.0
    %173 = vmatpush1.msra.mxu0 %v165
    %174 = vmatprep.subr.mxu0 0.0
    %175 = vmatpush1.msra.mxu0 %v164
    %176 = vmatprep.subr.mxu0 0.0
    %177 = vmatpush1.msra.mxu0 %v163
    %178 = vmatprep.subr.mxu0 0.0
    %179 = vmatpush1.msra.mxu0 %v162
    %180 = vmatprep.subr.mxu0 0.0
    %181 = vmatpush1.msra.mxu0 %v161
    %182 = vmatprep.subr.mxu0 0.0
    %183 = vmatpush1.msra.mxu0 %v160
    %184 = vmatprep.subr.mxu0 0.0
    %185 = vmatpush1.msra.mxu0 %v159
    %186 = vmatprep.subr.mxu0 0.0
    %187 = vmatpush1.msra.mxu0 %v158
    %188 = vmatprep.subr.mxu0 0.0
    %189 = vmatpush1.msra.mxu0 %v157
    %190 = vmatprep.subr.mxu0 0.0
    %191 = vmatpush1.msra.mxu0 %v156
    %192 = vmatprep.subr.mxu0 0.0
    %193 = vmatpush1.msra.mxu0 %v155
    %194 = vmatprep.subr.mxu0 0.0
    %195 = vmatpush1.msra.mxu0 %v154
    %196 = vmatprep.subr.mxu0 0.0
    %197 = vmatpush1.msra.mxu0 %v153
    %198 = vmatprep.subr.mxu0 0.0
    %199 = vmatpush1.msra.mxu0 %v152
    %200 = vmatprep.subr.mxu0 0.0
    %201 = vmatpush2.msra.mxu0 0.0
    %202 = vmatprep.subr.mxu0 0.0
    %203 = vmatpush2.msra.mxu0 0.0
    %204 = vmatprep.subr.mxu0 0.0
    %205 = vmatpush2.msra.mxu0 0.0
    %206 = vmatprep.subr.mxu0 0.0
    %207 = vmatpush2.msra.mxu0 0.0
    %208 = vmatprep.subr.mxu0 0.0
    %209 = vmatpush2.msra.mxu0 0.0
    %210 = vmatprep.subr.mxu0 0.0
    %211 = vmatpush2.msra.mxu0 0.0
    %212 = vmatprep.subr.mxu0 0.0
    %213 = vmatpush2.msra.mxu0 0.0
    %214 = vmatprep.subr.mxu0 0.0
    %215 = vmatpush2.msra.mxu0 0.0
    %216 = vmatprep.subr.mxu0 0.0
    %217 = vmatpush2.msra.mxu0 0.0
    %218 = vmatprep.subr.mxu0 0.0
    %219 = vmatpush2.msra.mxu0 0.0
    %220 = vmatprep.subr.mxu0 0.0
    %221 = vmatpush2.msra.mxu0 0.0
    %222 = vmatprep.subr.mxu0 0.0
    %223 = vmatpush2.msra.mxu0 0.0
    %224 = vmatprep.subr.mxu0 0.0
    %225 = vmatpush2.msra.mxu0 0.0
    %226 = vmatprep.subr.mxu0 0.0
    %227 = vmatpush2.msra.mxu0 0.0
    %228 = vmatprep.subr.mxu0 0.0
    %229 = vmatpush2.msra.mxu0 0.0
    %230 = vmatprep.subr.mxu0 0.0
    %231 = vmatpush2.msra.mxu0 0.0
    %232 = vmatprep.mubr.f32.mxu0 0.0
    %233 = vmatmul.mubr.f32.gmra.mxu0 %v120
    %v234 = vpop.f32.mrf.mxu0
    %v235 = vadd.f32 0.0, %v234
    %v236 = vpop.f32.mrf.mxu0
    %237 = vmatprep.mubr.f32.mxu0 0.0
    %238 = vmatmul.mubr.f32.gmra.mxu0 %v121
    %v239 = vpop.f32.mrf.mxu0
    %v240 = vadd.f32 0.0, %v239
    %v241 = vpop.f32.mrf.mxu0
    %242 = vmatprep.mubr.f32.mxu0 0.0
    %243 = vmatmul.mubr.f32.gmra.mxu0 %v122
    %v244 = vpop.f32.mrf.mxu0
    %v245 = vadd.f32 0.0, %v244
    %v246 = vpop.f32.mrf.mxu0
    %247 = vmatprep.mubr.f32.mxu0 0.0
    %248 = vmatmul.mubr.f32.gmra.mxu0 %v123
    %v249 = vpop.f32.mrf.mxu0
    %v250 = vadd.f32 0.0, %v249
    %v251 = vpop.f32.mrf.mxu0
    %252 = vmatprep.mubr.f32.mxu0 0.0
    %253 = vmatmul.mubr.f32.gmra.mxu0 %v124
    %v254 = vpop.f32.mrf.mxu0
    %v255 = vadd.f32 0.0, %v254
    %v256 = vpop.f32.mrf.mxu0
    %257 = vmatprep.mubr.f32.mxu0 0.0
    %258 = vmatmul.mubr.f32.gmra.mxu0 %v125
    %v259 = vpop.f32.mrf.mxu0
    %v260 = vadd.f32 0.0, %v259
    %v261 = vpop.f32.mrf.mxu0
    %262 = vmatprep.mubr.f32.mxu0 0.0
    %263 = vmatmul.mubr.f32.gmra.mxu0 %v126
    %v264 = vpop.f32.mrf.mxu0
    %v265 = vadd.f32 0.0, %v264
    %v266 = vpop.f32.mrf.mxu0
    %267 = vmatprep.mubr.f32.mxu0 0.0
    %268 = vmatmul.mubr.f32.gmra.mxu0 %v127
    %v269 = vpop.f32.mrf.mxu0
    %v270 = vadd.f32 0.0, %v269
    %v271 = vpop.f32.mrf.mxu0
    %272 = vmatprep.mubr.f32.mxu0 0.0
    %273 = vmatmul.mubr.f32.gmra.mxu0 %v128
    %v274 = vpop.f32.mrf.mxu0
    %v275 = vadd.f32 0.0, %v274
    %v276 = vpop.f32.mrf.mxu0
    %277 = vmatprep.mubr.f32.mxu0 0.0
    %278 = vmatmul.mubr.f32.gmra.mxu0 %v129
    %v279 = vpop.f32.mrf.mxu0
    %v280 = vadd.f32 0.0, %v279
    %v281 = vpop.f32.mrf.mxu0
    %282 = vmatprep.mubr.f32.mxu0 0.0
    %283 = vmatmul.mubr.f32.gmra.mxu0 %v130
    %v284 = vpop.f32.mrf.mxu0
    %v285 = vadd.f32 0.0, %v284
    %v286 = vpop.f32.mrf.mxu0
    %287 = vmatprep.mubr.f32.mxu0 0.0
    %288 = vmatmul.mubr.f32.gmra.mxu0 %v131
    %v289 = vpop.f32.mrf.mxu0
    %v290 = vadd.f32 0.0, %v289
    %v291 = vpop.f32.mrf.mxu0
    %292 = vmatprep.mubr.f32.mxu0 0.0
    %293 = vmatmul.mubr.f32.gmra.mxu0 %v132
    %v294 = vpop.f32.mrf.mxu0
    %v295 = vadd.f32 0.0, %v294
    %v296 = vpop.f32.mrf.mxu0
    %297 = vmatprep.mubr.f32.mxu0 0.0
    %298 = vmatmul.mubr.f32.gmra.mxu0 %v133
    %v299 = vpop.f32.mrf.mxu0
    %v300 = vadd.f32 0.0, %v299
    %v301 = vpop.f32.mrf.mxu0
    %302 = vmatprep.mubr.f32.mxu0 0.0
    %303 = vmatmul.mubr.f32.gmra.mxu0 %v134
    %v304 = vpop.f32.mrf.mxu0
    %v305 = vadd.f32 0.0, %v304
    %v306 = vpop.f32.mrf.mxu0
    %307 = vmatprep.mubr.f32.mxu0 0.0
    %308 = vmatmul.mubr.f32.gmra.mxu0 %v135
    %v309 = vpop.f32.mrf.mxu0
    %v310 = vadd.f32 0.0, %v309
    %v311 = vpop.f32.mrf.mxu0
    %312 = vmatprep.mubr.f32.mxu0 0.0
    %313 = vmatmul.mubr.f32.gmra.mxu0 %v136
    %v314 = vpop.f32.mrf.mxu0
    %v315 = vadd.f32 0.0, %v314
    %v316 = vpop.f32.mrf.mxu0
    %317 = vmatprep.mubr.f32.mxu0 0.0
    %318 = vmatmul.mubr.f32.gmra.mxu0 %v137
    %v319 = vpop.f32.mrf.mxu0
    %v320 = vadd.f32 0.0, %v319
    %v321 = vpop.f32.mrf.mxu0
    %322 = vmatprep.mubr.f32.mxu0 0.0
    %323 = vmatmul.mubr.f32.gmra.mxu0 %v138
    %v324 = vpop.f32.mrf.mxu0
    %v325 = vadd.f32 0.0, %v324
    %v326 = vpop.f32.mrf.mxu0
    %327 = vmatprep.mubr.f32.mxu0 0.0
    %328 = vmatmul.mubr.f32.gmra.mxu0 %v139
    %v329 = vpop.f32.mrf.mxu0
    %v330 = vadd.f32 0.0, %v329
    %v331 = vpop.f32.mrf.mxu0
    %332 = vmatprep.mubr.f32.mxu0 0.0
    %333 = vmatmul.mubr.f32.gmra.mxu0 %v140
    %v334 = vpop.f32.mrf.mxu0
    %v335 = vadd.f32 0.0, %v334
    %v336 = vpop.f32.mrf.mxu0
    %337 = vmatprep.mubr.f32.mxu0 0.0
    %338 = vmatmul.mubr.f32.gmra.mxu0 %v141
    %v339 = vpop.f32.mrf.mxu0
    %v340 = vadd.f32 0.0, %v339
    %v341 = vpop.f32.mrf.mxu0
    %342 = vmatprep.mubr.f32.mxu0 0.0
    %343 = vmatmul.mubr.f32.gmra.mxu0 %v142
    %v344 = vpop.f32.mrf.mxu0
    %v345 = vadd.f32 0.0, %v344
    %v346 = vpop.f32.mrf.mxu0
    %347 = vmatprep.mubr.f32.mxu0 0.0
    %348 = vmatmul.mubr.f32.gmra.mxu0 %v143
    %v349 = vpop.f32.mrf.mxu0
    %v350 = vadd.f32 0.0, %v349
    %v351 = vpop.f32.mrf.mxu0
    %352 = vmatprep.mubr.f32.mxu0 0.0
    %353 = vmatmul.mubr.f32.gmra.mxu0 %v144
    %v354 = vpop.f32.mrf.mxu0
    %v355 = vadd.f32 0.0, %v354
    %v356 = vpop.f32.mrf.mxu0
    %357 = vmatprep.mubr.f32.mxu0 0.0
    %358 = vmatmul.mubr.f32.gmra.mxu0 %v145
    %v359 = vpop.f32.mrf.mxu0
    %v360 = vadd.f32 0.0, %v359
    %v361 = vpop.f32.mrf.mxu0
    %362 = vmatprep.mubr.f32.mxu0 0.0
    %363 = vmatmul.mubr.f32.gmra.mxu0 %v146
    %v364 = vpop.f32.mrf.mxu0
    %v365 = vadd.f32 0.0, %v364
    %v366 = vpop.f32.mrf.mxu0
    %367 = vmatprep.mubr.f32.mxu0 0.0
    %368 = vmatmul.mubr.f32.gmra.mxu0 %v147
    %v369 = vpop.f32.mrf.mxu0
    %v370 = vadd.f32 0.0, %v369
    %v371 = vpop.f32.mrf.mxu0
    %372 = vmatprep.mubr.f32.mxu0 0.0
    %373 = vmatmul.mubr.f32.gmra.mxu0 %v148
    %v374 = vpop.f32.mrf.mxu0
    %v375 = vadd.f32 0.0, %v374
    %v376 = vpop.f32.mrf.mxu0
    %377 = vmatprep.mubr.f32.mxu0 0.0
    %378 = vmatmul.mubr.f32.gmra.mxu0 %v149
    %v379 = vpop.f32.mrf.mxu0
    %v380 = vadd.f32 0.0, %v379
    %v381 = vpop.f32.mrf.mxu0
    %382 = vmatprep.mubr.f32.mxu0 0.0
    %383 = vmatmul.mubr.f32.gmra.mxu0 %v150
    %v384 = vpop.f32.mrf.mxu0
    %v385 = vadd.f32 0.0, %v384
    %v386 = vpop.f32.mrf.mxu0
    %387 = vmatprep.mubr.f32.mxu0 0.0
    %388 = vmatmul.mubr.f32.gmra.mxu0 %v151
    %v389 = vpop.f32.mrf.mxu0
    %v390 = vadd.f32 0.0, %v389
    %v391 = vpop.f32.mrf.mxu0
    %392 = vdwg.mxu0
    %393 = vmatprep.subr.mxu0 0.0
    %394 = vmatpush1.msra.mxu0 %v310
    %395 = vmatprep.subr.mxu0 0.0
    %396 = vmatpush1.msra.mxu0 %v305
    %397 = vmatprep.subr.mxu0 0.0
    %398 = vmatpush1.msra.mxu0 %v300
    %399 = vmatprep.subr.mxu0 0.0
    %400 = vmatpush1.msra.mxu0 %v295
    %401 = vmatprep.subr.mxu0 0.0
    %402 = vmatpush1.msra.mxu0 %v290
    %403 = vmatprep.subr.mxu0 0.0
    %404 = vmatpush1.msra.mxu0 %v285
    %405 = vmatprep.subr.mxu0 0.0
    %406 = vmatpush1.msra.mxu0 %v280
    %407 = vmatprep.subr.mxu0 0.0
    %408 = vmatpush1.msra.mxu0 %v275
    %409 = vmatprep.subr.mxu0 0.0
    %410 = vmatpush1.msra.mxu0 %v270
    %411 = vmatprep.subr.mxu0 0.0
    %412 = vmatpush1.msra.mxu0 %v265
    %413 = vmatprep.subr.mxu0 0.0
    %414 = vmatpush1.msra.mxu0 %v260
    %415 = vmatprep.subr.mxu0 0.0
    %416 = vmatpush1.msra.mxu0 %v255
    %417 = vmatprep.subr.mxu0 0.0
    %418 = vmatpush1.msra.mxu0 %v250
    %419 = vmatprep.subr.mxu0 0.0
    %420 = vmatpush1.msra.mxu0 %v245
    %421 = vmatprep.subr.mxu0 0.0
    %422 = vmatpush1.msra.mxu0 %v240
    %423 = vmatprep.subr.mxu0 0.0
    %424 = vmatpush1.msra.mxu0 %v235
    %425 = vmatprep.subr.mxu0 0.0
    %426 = vmatpush2.msra.mxu0 %v390
    %427 = vmatprep.subr.mxu0 0.0
    %428 = vmatpush2.msra.mxu0 %v385
    %429 = vmatprep.subr.mxu0 0.0
    %430 = vmatpush2.msra.mxu0 %v380
    %431 = vmatprep.subr.mxu0 0.0
    %432 = vmatpush2.msra.mxu0 %v375
    %433 = vmatprep.subr.mxu0 0.0
    %434 = vmatpush2.msra.mxu0 %v370
    %435 = vmatprep.subr.mxu0 0.0
    %436 = vmatpush2.msra.mxu0 %v365
    %437 = vmatprep.subr.mxu0 0.0
    %438 = vmatpush2.msra.mxu0 %v360
    %439 = vmatprep.subr.mxu0 0.0
    %440 = vmatpush2.msra.mxu0 %v355
    %441 = vmatprep.subr.mxu0 0.0
    %442 = vmatpush2.msra.mxu0 %v350
    %443 = vmatprep.subr.mxu0 0.0
    %444 = vmatpush2.msra.mxu0 %v345
    %445 = vmatprep.subr.mxu0 0.0
    %446 = vmatpush2.msra.mxu0 %v340
    %447 = vmatprep.subr.mxu0 0.0
    %448 = vmatpush2.msra.mxu0 %v335
    %449 = vmatprep.subr.mxu0 0.0
    %450 = vmatpush2.msra.mxu0 %v330
    %451 = vmatprep.subr.mxu0 0.0
    %452 = vmatpush2.msra.mxu0 %v325
    %453 = vmatprep.subr.mxu0 0.0
    %454 = vmatpush2.msra.mxu0 %v320
    %455 = vmatprep.subr.mxu0 0.0
    %456 = vmatpush2.msra.mxu0 %v315
    %457 = vmatprep.mubr.f32.mxu0 %v57
    %458 = vmatmul.mubr.f32.gmra.mxu0 %v56
    %v459 = vpop.f32.mrf.mxu0
    %v460 = vadd.f32 0.0, %v459
    %v461 = vpop.f32.mrf.mxu0
    %462 = vmatprep.mubr.f32.mxu0 %v59
    %463 = vmatmul.mubr.f32.gmra.mxu0 %v58
    %v464 = vpop.f32.mrf.mxu0
    %v465 = vadd.f32 0.0, %v464
    %v466 = vpop.f32.mrf.mxu0
    %467 = vmatprep.mubr.f32.mxu0 %v61
    %468 = vmatmul.mubr.f32.gmra.mxu0 %v60
    %v469 = vpop.f32.mrf.mxu0
    %v470 = vadd.f32 0.0, %v469
    %v471 = vpop.f32.mrf.mxu0
    %472 = vmatprep.mubr.f32.mxu0 %v63
    %473 = vmatmul.mubr.f32.gmra.mxu0 %v62
    %v474 = vpop.f32.mrf.mxu0
    %v475 = vadd.f32 0.0, %v474
    %v476 = vpop.f32.mrf.mxu0
    %477 = vmatprep.mubr.f32.mxu0 %v65
    %478 = vmatmul.mubr.f32.gmra.mxu0 %v64
    %v479 = vpop.f32.mrf.mxu0
    %v480 = vadd.f32 0.0, %v479
    %v481 = vpop.f32.mrf.mxu0
    %482 = vmatprep.mubr.f32.mxu0 %v67
    %483 = vmatmul.mubr.f32.gmra.mxu0 %v66
    %v484 = vpop.f32.mrf.mxu0
    %v485 = vadd.f32 0.0, %v484
    %v486 = vpop.f32.mrf.mxu0
    %487 = vmatprep.mubr.f32.mxu0 %v69
    %488 = vmatmul.mubr.f32.gmra.mxu0 %v68
    %v489 = vpop.f32.mrf.mxu0
    %v490 = vadd.f32 0.0, %v489
    %v491 = vpop.f32.mrf.mxu0
    %492 = vmatprep.mubr.f32.mxu0 %v71
    %493 = vmatmul.mubr.f32.gmra.mxu0 %v70
    %v494 = vpop.f32.mrf.mxu0
    %v495 = vadd.f32 0.0, %v494
    %v496 = vpop.f32.mrf.mxu0
    %497 = vmatprep.mubr.f32.mxu0 %v73
    %498 = vmatmul.mubr.f32.gmra.mxu0 %v72
    %v499 = vpop.f32.mrf.mxu0
    %v500 = vadd.f32 0.0, %v499
    %v501 = vpop.f32.mrf.mxu0
    %502 = vmatprep.mubr.f32.mxu0 %v75
    %503 = vmatmul.mubr.f32.gmra.mxu0 %v74
    %v504 = vpop.f32.mrf.mxu0
    %v505 = vadd.f32 0.0, %v504
    %v506 = vpop.f32.mrf.mxu0
    %507 = vmatprep.mubr.f32.mxu0 %v77
    %508 = vmatmul.mubr.f32.gmra.mxu0 %v76
    %v509 = vpop.f32.mrf.mxu0
    %v510 = vadd.f32 0.0, %v509
    %v511 = vpop.f32.mrf.mxu0
    %512 = vmatprep.mubr.f32.mxu0 %v79
    %513 = vmatmul.mubr.f32.gmra.mxu0 %v78
    %v514 = vpop.f32.mrf.mxu0
    %v515 = vadd.f32 0.0, %v514
    %v516 = vpop.f32.mrf.mxu0
    %517 = vmatprep.mubr.f32.mxu0 %v81
    %518 = vmatmul.mubr.f32.gmra.mxu0 %v80
    %v519 = vpop.f32.mrf.mxu0
    %v520 = vadd.f32 0.0, %v519
    %v521 = vpop.f32.mrf.mxu0
    %522 = vmatprep.mubr.f32.mxu0 %v83
    %523 = vmatmul.mubr.f32.gmra.mxu0 %v82
    %v524 = vpop.f32.mrf.mxu0
    %v525 = vadd.f32 0.0, %v524
    %v526 = vpop.f32.mrf.mxu0
    %527 = vmatprep.mubr.f32.mxu0 %v85
    %528 = vmatmul.mubr.f32.gmra.mxu0 %v84
    %v529 = vpop.f32.mrf.mxu0
    %v530 = vadd.f32 0.0, %v529
    %v531 = vpop.f32.mrf.mxu0
    %532 = vmatprep.mubr.f32.mxu0 %v87
    %533 = vmatmul.mubr.f32.gmra.mxu0 %v86
    %v534 = vpop.f32.mrf.mxu0
    %v535 = vadd.f32 0.0, %v534
    %v536 = vpop.f32.mrf.mxu0
    %537 = vmatprep.mubr.f32.mxu0 %v89
    %538 = vmatmul.mubr.f32.gmra.mxu0 %v88
    %v539 = vpop.f32.mrf.mxu0
    %v540 = vadd.f32 0.0, %v539
    %v541 = vpop.f32.mrf.mxu0
    %542 = vmatprep.mubr.f32.mxu0 %v91
    %543 = vmatmul.mubr.f32.gmra.mxu0 %v90
    %v544 = vpop.f32.mrf.mxu0
    %v545 = vadd.f32 0.0, %v544
    %v546 = vpop.f32.mrf.mxu0
    %547 = vmatprep.mubr.f32.mxu0 %v93
    %548 = vmatmul.mubr.f32.gmra.mxu0 %v92
    %v549 = vpop.f32.mrf.mxu0
    %v550 = vadd.f32 0.0, %v549
    %v551 = vpop.f32.mrf.mxu0
    %552 = vmatprep.mubr.f32.mxu0 %v95
    %553 = vmatmul.mubr.f32.gmra.mxu0 %v94
    %v554 = vpop.f32.mrf.mxu0
    %v555 = vadd.f32 0.0, %v554
    %v556 = vpop.f32.mrf.mxu0
    %557 = vmatprep.mubr.f32.mxu0 %v97
    %558 = vmatmul.mubr.f32.gmra.mxu0 %v96
    %v559 = vpop.f32.mrf.mxu0
    %v560 = vadd.f32 0.0, %v559
    %v561 = vpop.f32.mrf.mxu0
    %562 = vmatprep.mubr.f32.mxu0 %v99
    %563 = vmatmul.mubr.f32.gmra.mxu0 %v98
    %v564 = vpop.f32.mrf.mxu0
    %v565 = vadd.f32 0.0, %v564
    %v566 = vpop.f32.mrf.mxu0
    %567 = vmatprep.mubr.f32.mxu0 %v101
    %568 = vmatmul.mubr.f32.gmra.mxu0 %v100
    %v569 = vpop.f32.mrf.mxu0
    %v570 = vadd.f32 0.0, %v569
    %v571 = vpop.f32.mrf.mxu0
    %572 = vmatprep.mubr.f32.mxu0 %v103
    %573 = vmatmul.mubr.f32.gmra.mxu0 %v102
    %v574 = vpop.f32.mrf.mxu0
    %v575 = vadd.f32 0.0, %v574
    %v576 = vpop.f32.mrf.mxu0
    %577 = vmatprep.mubr.f32.mxu0 %v105
    %578 = vmatmul.mubr.f32.gmra.mxu0 %v104
    %v579 = vpop.f32.mrf.mxu0
    %v580 = vadd.f32 0.0, %v579
    %v581 = vpop.f32.mrf.mxu0
    %582 = vmatprep.mubr.f32.mxu0 %v107
    %583 = vmatmul.mubr.f32.gmra.mxu0 %v106
    %v584 = vpop.f32.mrf.mxu0
    %v585 = vadd.f32 0.0, %v584
    %v586 = vpop.f32.mrf.mxu0
    %587 = vmatprep.mubr.f32.mxu0 %v109
    %588 = vmatmul.mubr.f32.gmra.mxu0 %v108
    %v589 = vpop.f32.mrf.mxu0
    %v590 = vadd.f32 0.0, %v589
    %v591 = vpop.f32.mrf.mxu0
    %592 = vmatprep.mubr.f32.mxu0 %v111
    %593 = vmatmul.mubr.f32.gmra.mxu0 %v110
    %v594 = vpop.f32.mrf.mxu0
    %v595 = vadd.f32 0.0, %v594
    %v596 = vpop.f32.mrf.mxu0
    %597 = vmatprep.mubr.f32.mxu0 %v113
    %598 = vmatmul.mubr.f32.gmra.mxu0 %v112
    %v599 = vpop.f32.mrf.mxu0
    %v600 = vadd.f32 0.0, %v599
    %v601 = vpop.f32.mrf.mxu0
    %602 = vmatprep.mubr.f32.mxu0 %v115
    %603 = vmatmul.mubr.f32.gmra.mxu0 %v114
    %v604 = vpop.f32.mrf.mxu0
    %v605 = vadd.f32 0.0, %v604
    %v606 = vpop.f32.mrf.mxu0
    %607 = vmatprep.mubr.f32.mxu0 %v117
    %608 = vmatmul.mubr.f32.gmra.mxu0 %v116
    %v609 = vpop.f32.mrf.mxu0
    %v610 = vadd.f32 0.0, %v609
    %v611 = vpop.f32.mrf.mxu0
    %612 = vmatprep.mubr.f32.mxu0 %v119
    %613 = vmatmul.mubr.f32.gmra.mxu0 %v118
    %v614 = vpop.f32.mrf.mxu0
    %v615 = vadd.f32 0.0, %v614
    %v616 = vpop.f32.mrf.mxu0
    %617 = vdwg.mxu0
    %v618 = vmax.f32 %v460, 0.0
    %v619 = vmax.f32 %v465, 0.0
    %v620 = vmax.f32 %v470, 0.0
    %v621 = vmax.f32 %v475, 0.0
    %v622 = vmax.f32 %v480, 0.0
    %v623 = vmax.f32 %v485, 0.0
    %v624 = vmax.f32 %v490, 0.0
    %v625 = vmax.f32 %v495, 0.0
    %v626 = vmax.f32 %v500, 0.0
    %v627 = vmax.f32 %v505, 0.0
    %v628 = vmax.f32 %v510, 0.0
    %v629 = vmax.f32 %v515, 0.0
    %v630 = vmax.f32 %v520, 0.0
    %v631 = vmax.f32 %v525, 0.0
    %v632 = vmax.f32 %v530, 0.0
    %v633 = vmax.f32 %v535, 0.0
    %v634 = vmax.f32 %v540, 0.0
    %v635 = vmax.f32 %v545, 0.0
    %v636 = vmax.f32 %v550, 0.0
    %v637 = vmax.f32 %v555, 0.0
    %v638 = vmax.f32 %v560, 0.0
    %v639 = vmax.f32 %v565, 0.0
    %v640 = vmax.f32 %v570, 0.0
    %v641 = vmax.f32 %v575, 0.0
    %v642 = vmax.f32 %v580, 0.0
    %v643 = vmax.f32 %v585, 0.0
    %v644 = vmax.f32 %v590, 0.0
    %v645 = vmax.f32 %v595, 0.0
    %v646 = vmax.f32 %v600, 0.0
    %v647 = vmax.f32 %v605, 0.0
    %v648 = vmax.f32 %v610, 0.0
    %v649 = vmax.f32 %v615, 0.0
    %s650 = scalar_lea.vmem [#allocation7], 128
    %v651 = vld [vmem:[%s650] sm:$0xff]
    %v652 = vld [vmem:[%s650 + $0x8] sm:$0xff]
    %v653 = vld [vmem:[%s650 + $0x10] sm:$0xff]
    %v654 = vld [vmem:[%s650 + $0x18] sm:$0xff]
    %v655 = vld [vmem:[%s650 + $0x20] sm:$0xff]
    %v656 = vld [vmem:[%s650 + $0x28] sm:$0xff]
    %v657 = vld [vmem:[%s650 + $0x30] sm:$0xff]
    %v658 = vld [vmem:[%s650 + $0x38] sm:$0xff]
    %v659 = vld [vmem:[%s650 + $0x40] sm:$0xff]
    %v660 = vld [vmem:[%s650 + $0x48] sm:$0xff]
    %v661 = vld [vmem:[%s650 + $0x50] sm:$0xff]
    %v662 = vld [vmem:[%s650 + $0x58] sm:$0xff]
    %v663 = vld [vmem:[%s650 + $0x60] sm:$0xff]
    %v664 = vld [vmem:[%s650 + $0x68] sm:$0xff]
    %v665 = vld [vmem:[%s650 + $0x70] sm:$0xff]
    %v666 = vld [vmem:[%s650 + $0x78] sm:$0xff]
    %667 = vmatprep.subr.mxu0 0.0
    %668 = vmatpush1.msra.mxu0 %v666
    %669 = vmatprep.subr.mxu0 0.0
    %670 = vmatpush1.msra.mxu0 %v665
    %671 = vmatprep.subr.mxu0 0.0
    %672 = vmatpush1.msra.mxu0 %v664
    %673 = vmatprep.subr.mxu0 0.0
    %674 = vmatpush1.msra.mxu0 %v663
    %675 = vmatprep.subr.mxu0 0.0
    %676 = vmatpush1.msra.mxu0 %v662
    %677 = vmatprep.subr.mxu0 0.0
    %678 = vmatpush1.msra.mxu0 %v661
    %679 = vmatprep.subr.mxu0 0.0
    %680 = vmatpush1.msra.mxu0 %v660
    %681 = vmatprep.subr.mxu0 0.0
    %682 = vmatpush1.msra.mxu0 %v659
    %683 = vmatprep.subr.mxu0 0.0
    %684 = vmatpush1.msra.mxu0 %v658
    %685 = vmatprep.subr.mxu0 0.0
    %686 = vmatpush1.msra.mxu0 %v657
    %687 = vmatprep.subr.mxu0 0.0
    %688 = vmatpush1.msra.mxu0 %v656
    %689 = vmatprep.subr.mxu0 0.0
    %690 = vmatpush1.msra.mxu0 %v655
    %691 = vmatprep.subr.mxu0 0.0
    %692 = vmatpush1.msra.mxu0 %v654
    %693 = vmatprep.subr.mxu0 0.0
    %694 = vmatpush1.msra.mxu0 %v653
    %695 = vmatprep.subr.mxu0 0.0
    %696 = vmatpush1.msra.mxu0 %v652
    %697 = vmatprep.subr.mxu0 0.0
    %698 = vmatpush1.msra.mxu0 %v651
    %699 = vmatprep.subr.mxu0 0.0
    %700 = vmatpush2.msra.mxu0 0.0
    %701 = vmatprep.subr.mxu0 0.0
    %702 = vmatpush2.msra.mxu0 0.0
    %703 = vmatprep.subr.mxu0 0.0
    %704 = vmatpush2.msra.mxu0 0.0
    %705 = vmatprep.subr.mxu0 0.0
    %706 = vmatpush2.msra.mxu0 0.0
    %707 = vmatprep.subr.mxu0 0.0
    %708 = vmatpush2.msra.mxu0 0.0
    %709 = vmatprep.subr.mxu0 0.0
    %710 = vmatpush2.msra.mxu0 0.0
    %711 = vmatprep.subr.mxu0 0.0
    %712 = vmatpush2.msra.mxu0 0.0
    %713 = vmatprep.subr.mxu0 0.0
    %714 = vmatpush2.msra.mxu0 0.0
    %715 = vmatprep.subr.mxu0 0.0
    %716 = vmatpush2.msra.mxu0 0.0
    %717 = vmatprep.subr.mxu0 0.0
    %718 = vmatpush2.msra.mxu0 0.0
    %719 = vmatprep.subr.mxu0 0.0
    %720 = vmatpush2.msra.mxu0 0.0
    %721 = vmatprep.subr.mxu0 0.0
    %722 = vmatpush2.msra.mxu0 0.0
    %723 = vmatprep.subr.mxu0 0.0
    %724 = vmatpush2.msra.mxu0 0.0
    %725 = vmatprep.subr.mxu0 0.0
    %726 = vmatpush2.msra.mxu0 0.0
    %727 = vmatprep.subr.mxu0 0.0
    %728 = vmatpush2.msra.mxu0 0.0
    %729 = vmatprep.subr.mxu0 0.0
    %730 = vmatpush2.msra.mxu0 0.0
    %731 = vmatprep.mubr.f32.mxu0 0.0
    %732 = vmatmul.mubr.f32.gmra.mxu0 %v618
    %v733 = vpop.f32.mrf.mxu0
    %v734 = vadd.f32 0.0, %v733
    %v735 = vpop.f32.mrf.mxu0
    %736 = vmatprep.mubr.f32.mxu0 0.0
    %737 = vmatmul.mubr.f32.gmra.mxu0 %v619
    %v738 = vpop.f32.mrf.mxu0
    %v739 = vadd.f32 0.0, %v738
    %v740 = vpop.f32.mrf.mxu0
    %741 = vmatprep.mubr.f32.mxu0 0.0
    %742 = vmatmul.mubr.f32.gmra.mxu0 %v620
    %v743 = vpop.f32.mrf.mxu0
    %v744 = vadd.f32 0.0, %v743
    %v745 = vpop.f32.mrf.mxu0
    %746 = vmatprep.mubr.f32.mxu0 0.0
    %747 = vmatmul.mubr.f32.gmra.mxu0 %v621
    %v748 = vpop.f32.mrf.mxu0
    %v749 = vadd.f32 0.0, %v748
    %v750 = vpop.f32.mrf.mxu0
    %751 = vmatprep.mubr.f32.mxu0 0.0
    %752 = vmatmul.mubr.f32.gmra.mxu0 %v622
    %v753 = vpop.f32.mrf.mxu0
    %v754 = vadd.f32 0.0, %v753
    %v755 = vpop.f32.mrf.mxu0
    %756 = vmatprep.mubr.f32.mxu0 0.0
    %757 = vmatmul.mubr.f32.gmra.mxu0 %v623
    %v758 = vpop.f32.mrf.mxu0
    %v759 = vadd.f32 0.0, %v758
    %v760 = vpop.f32.mrf.mxu0
    %761 = vmatprep.mubr.f32.mxu0 0.0
    %762 = vmatmul.mubr.f32.gmra.mxu0 %v624
    %v763 = vpop.f32.mrf.mxu0
    %v764 = vadd.f32 0.0, %v763
    %v765 = vpop.f32.mrf.mxu0
    %766 = vmatprep.mubr.f32.mxu0 0.0
    %767 = vmatmul.mubr.f32.gmra.mxu0 %v625
    %v768 = vpop.f32.mrf.mxu0
    %v769 = vadd.f32 0.0, %v768
    %v770 = vpop.f32.mrf.mxu0
    %771 = vmatprep.mubr.f32.mxu0 0.0
    %772 = vmatmul.mubr.f32.gmra.mxu0 %v626
    %v773 = vpop.f32.mrf.mxu0
    %v774 = vadd.f32 0.0, %v773
    %v775 = vpop.f32.mrf.mxu0
    %776 = vmatprep.mubr.f32.mxu0 0.0
    %777 = vmatmul.mubr.f32.gmra.mxu0 %v627
    %v778 = vpop.f32.mrf.mxu0
    %v779 = vadd.f32 0.0, %v778
    %v780 = vpop.f32.mrf.mxu0
    %781 = vmatprep.mubr.f32.mxu0 0.0
    %782 = vmatmul.mubr.f32.gmra.mxu0 %v628
    %v783 = vpop.f32.mrf.mxu0
    %v784 = vadd.f32 0.0, %v783
    %v785 = vpop.f32.mrf.mxu0
    %786 = vmatprep.mubr.f32.mxu0 0.0
    %787 = vmatmul.mubr.f32.gmra.mxu0 %v629
    %v788 = vpop.f32.mrf.mxu0
    %v789 = vadd.f32 0.0, %v788
    %v790 = vpop.f32.mrf.mxu0
    %791 = vmatprep.mubr.f32.mxu0 0.0
    %792 = vmatmul.mubr.f32.gmra.mxu0 %v630
    %v793 = vpop.f32.mrf.mxu0
    %v794 = vadd.f32 0.0, %v793
    %v795 = vpop.f32.mrf.mxu0
    %796 = vmatprep.mubr.f32.mxu0 0.0
    %797 = vmatmul.mubr.f32.gmra.mxu0 %v631
    %v798 = vpop.f32.mrf.mxu0
    %v799 = vadd.f32 0.0, %v798
    %v800 = vpop.f32.mrf.mxu0
    %801 = vmatprep.mubr.f32.mxu0 0.0
    %802 = vmatmul.mubr.f32.gmra.mxu0 %v632
    %v803 = vpop.f32.mrf.mxu0
    %v804 = vadd.f32 0.0, %v803
    %v805 = vpop.f32.mrf.mxu0
    %806 = vmatprep.mubr.f32.mxu0 0.0
    %807 = vmatmul.mubr.f32.gmra.mxu0 %v633
    %v808 = vpop.f32.mrf.mxu0
    %v809 = vadd.f32 0.0, %v808
    %v810 = vpop.f32.mrf.mxu0
    %811 = vmatprep.mubr.f32.mxu0 0.0
    %812 = vmatmul.mubr.f32.gmra.mxu0 %v634
    %v813 = vpop.f32.mrf.mxu0
    %v814 = vadd.f32 0.0, %v813
    %v815 = vpop.f32.mrf.mxu0
    %816 = vmatprep.mubr.f32.mxu0 0.0
    %817 = vmatmul.mubr.f32.gmra.mxu0 %v635
    %v818 = vpop.f32.mrf.mxu0
    %v819 = vadd.f32 0.0, %v818
    %v820 = vpop.f32.mrf.mxu0
    %821 = vmatprep.mubr.f32.mxu0 0.0
    %822 = vmatmul.mubr.f32.gmra.mxu0 %v636
    %v823 = vpop.f32.mrf.mxu0
    %v824 = vadd.f32 0.0, %v823
    %v825 = vpop.f32.mrf.mxu0
    %826 = vmatprep.mubr.f32.mxu0 0.0
    %827 = vmatmul.mubr.f32.gmra.mxu0 %v637
    %v828 = vpop.f32.mrf.mxu0
    %v829 = vadd.f32 0.0, %v828
    %v830 = vpop.f32.mrf.mxu0
    %831 = vmatprep.mubr.f32.mxu0 0.0
    %832 = vmatmul.mubr.f32.gmra.mxu0 %v638
    %v833 = vpop.f32.mrf.mxu0
    %v834 = vadd.f32 0.0, %v833
    %v835 = vpop.f32.mrf.mxu0
    %836 = vmatprep.mubr.f32.mxu0 0.0
    %837 = vmatmul.mubr.f32.gmra.mxu0 %v639
    %v838 = vpop.f32.mrf.mxu0
    %v839 = vadd.f32 0.0, %v838
    %v840 = vpop.f32.mrf.mxu0
    %841 = vmatprep.mubr.f32.mxu0 0.0
    %842 = vmatmul.mubr.f32.gmra.mxu0 %v640
    %v843 = vpop.f32.mrf.mxu0
    %v844 = vadd.f32 0.0, %v843
    %v845 = vpop.f32.mrf.mxu0
    %846 = vmatprep.mubr.f32.mxu0 0.0
    %847 = vmatmul.mubr.f32.gmra.mxu0 %v641
    %v848 = vpop.f32.mrf.mxu0
    %v849 = vadd.f32 0.0, %v848
    %v850 = vpop.f32.mrf.mxu0
    %851 = vmatprep.mubr.f32.mxu0 0.0
    %852 = vmatmul.mubr.f32.gmra.mxu0 %v642
    %v853 = vpop.f32.mrf.mxu0
    %v854 = vadd.f32 0.0, %v853
    %v855 = vpop.f32.mrf.mxu0
    %856 = vmatprep.mubr.f32.mxu0 0.0
    %857 = vmatmul.mubr.f32.gmra.mxu0 %v643
    %v858 = vpop.f32.mrf.mxu0
    %v859 = vadd.f32 0.0, %v858
    %v860 = vpop.f32.mrf.mxu0
    %861 = vmatprep.mubr.f32.mxu0 0.0
    %862 = vmatmul.mubr.f32.gmra.mxu0 %v644
    %v863 = vpop.f32.mrf.mxu0
    %v864 = vadd.f32 0.0, %v863
    %v865 = vpop.f32.mrf.mxu0
    %866 = vmatprep.mubr.f32.mxu0 0.0
    %867 = vmatmul.mubr.f32.gmra.mxu0 %v645
    %v868 = vpop.f32.mrf.mxu0
    %v869 = vadd.f32 0.0, %v868
    %v870 = vpop.f32.mrf.mxu0
    %871 = vmatprep.mubr.f32.mxu0 0.0
    %872 = vmatmul.mubr.f32.gmra.mxu0 %v646
    %v873 = vpop.f32.mrf.mxu0
    %v874 = vadd.f32 0.0, %v873
    %v875 = vpop.f32.mrf.mxu0
    %876 = vmatprep.mubr.f32.mxu0 0.0
    %877 = vmatmul.mubr.f32.gmra.mxu0 %v647
    %v878 = vpop.f32.mrf.mxu0
    %v879 = vadd.f32 0.0, %v878
    %v880 = vpop.f32.mrf.mxu0
    %881 = vmatprep.mubr.f32.mxu0 0.0
    %882 = vmatmul.mubr.f32.gmra.mxu0 %v648
    %v883 = vpop.f32.mrf.mxu0
    %v884 = vadd.f32 0.0, %v883
    %v885 = vpop.f32.mrf.mxu0
    %886 = vmatprep.mubr.f32.mxu0 0.0
    %887 = vmatmul.mubr.f32.gmra.mxu0 %v649
    %v888 = vpop.f32.mrf.mxu0
    %v889 = vadd.f32 0.0, %v888
    %v890 = vpop.f32.mrf.mxu0
    %891 = vdwg.mxu0
    %892 = vmatprep.subr.mxu0 0.0
    %893 = vmatpush1.msra.mxu0 %v809
    %894 = vmatprep.subr.mxu0 0.0
    %895 = vmatpush1.msra.mxu0 %v804
    %896 = vmatprep.subr.mxu0 0.0
    %897 = vmatpush1.msra.mxu0 %v799
    %898 = vmatprep.subr.mxu0 0.0
    %899 = vmatpush1.msra.mxu0 %v794
    %900 = vmatprep.subr.mxu0 0.0
    %901 = vmatpush1.msra.mxu0 %v789
    %902 = vmatprep.subr.mxu0 0.0
    %903 = vmatpush1.msra.mxu0 %v784
    %904 = vmatprep.subr.mxu0 0.0
    %905 = vmatpush1.msra.mxu0 %v779
    %906 = vmatprep.subr.mxu0 0.0
    %907 = vmatpush1.msra.mxu0 %v774
    %908 = vmatprep.subr.mxu0 0.0
    %909 = vmatpush1.msra.mxu0 %v769
    %910 = vmatprep.subr.mxu0 0.0
    %911 = vmatpush1.msra.mxu0 %v764
    %912 = vmatprep.subr.mxu0 0.0
    %913 = vmatpush1.msra.mxu0 %v759
    %914 = vmatprep.subr.mxu0 0.0
    %915 = vmatpush1.msra.mxu0 %v754
    %916 = vmatprep.subr.mxu0 0.0
    %917 = vmatpush1.msra.mxu0 %v749
    %918 = vmatprep.subr.mxu0 0.0
    %919 = vmatpush1.msra.mxu0 %v744
    %920 = vmatprep.subr.mxu0 0.0
    %921 = vmatpush1.msra.mxu0 %v739
    %922 = vmatprep.subr.mxu0 0.0
    %923 = vmatpush1.msra.mxu0 %v734
    %924 = vmatprep.subr.mxu0 0.0
    %925 = vmatpush2.msra.mxu0 %v889
    %926 = vmatprep.subr.mxu0 0.0
    %927 = vmatpush2.msra.mxu0 %v884
    %928 = vmatprep.subr.mxu0 0.0
    %929 = vmatpush2.msra.mxu0 %v879
    %930 = vmatprep.subr.mxu0 0.0
    %931 = vmatpush2.msra.mxu0 %v874
    %932 = vmatprep.subr.mxu0 0.0
    %933 = vmatpush2.msra.mxu0 %v869
    %934 = vmatprep.subr.mxu0 0.0
    %935 = vmatpush2.msra.mxu0 %v864
    %936 = vmatprep.subr.mxu0 0.0
    %937 = vmatpush2.msra.mxu0 %v859
    %938 = vmatprep.subr.mxu0 0.0
    %939 = vmatpush2.msra.mxu0 %v854
    %940 = vmatprep.subr.mxu0 0.0
    %941 = vmatpush2.msra.mxu0 %v849
    %942 = vmatprep.subr.mxu0 0.0
    %943 = vmatpush2.msra.mxu0 %v844
    %944 = vmatprep.subr.mxu0 0.0
    %945 = vmatpush2.msra.mxu0 %v839
    %946 = vmatprep.subr.mxu0 0.0
    %947 = vmatpush2.msra.mxu0 %v834
    %948 = vmatprep.subr.mxu0 0.0
    %949 = vmatpush2.msra.mxu0 %v829
    %950 = vmatprep.subr.mxu0 0.0
    %951 = vmatpush2.msra.mxu0 %v824
    %952 = vmatprep.subr.mxu0 0.0
    %953 = vmatpush2.msra.mxu0 %v819
    %954 = vmatprep.subr.mxu0 0.0
    %955 = vmatpush2.msra.mxu0 %v814
    %956 = vmatprep.mubr.f32.mxu0 %v57
    %957 = vmatmul.mubr.f32.gmra.mxu0 %v56
    %v958 = vpop.f32.mrf.mxu0
    %v959 = vadd.f32 0.0, %v958
    %v960 = vpop.f32.mrf.mxu0
    %961 = vmatprep.mubr.f32.mxu0 %v59
    %962 = vmatmul.mubr.f32.gmra.mxu0 %v58
    %v963 = vpop.f32.mrf.mxu0
    %v964 = vadd.f32 0.0, %v963
    %v965 = vpop.f32.mrf.mxu0
    %966 = vmatprep.mubr.f32.mxu0 %v61
    %967 = vmatmul.mubr.f32.gmra.mxu0 %v60
    %v968 = vpop.f32.mrf.mxu0
    %v969 = vadd.f32 0.0, %v968
    %v970 = vpop.f32.mrf.mxu0
    %971 = vmatprep.mubr.f32.mxu0 %v63
    %972 = vmatmul.mubr.f32.gmra.mxu0 %v62
    %v973 = vpop.f32.mrf.mxu0
    %v974 = vadd.f32 0.0, %v973
    %v975 = vpop.f32.mrf.mxu0
    %976 = vmatprep.mubr.f32.mxu0 %v65
    %977 = vmatmul.mubr.f32.gmra.mxu0 %v64
    %v978 = vpop.f32.mrf.mxu0
    %v979 = vadd.f32 0.0, %v978
    %v980 = vpop.f32.mrf.mxu0
    %981 = vmatprep.mubr.f32.mxu0 %v67
    %982 = vmatmul.mubr.f32.gmra.mxu0 %v66
    %v983 = vpop.f32.mrf.mxu0
    %v984 = vadd.f32 0.0, %v983
    %v985 = vpop.f32.mrf.mxu0
    %986 = vmatprep.mubr.f32.mxu0 %v69
    %987 = vmatmul.mubr.f32.gmra.mxu0 %v68
    %v988 = vpop.f32.mrf.mxu0
    %v989 = vadd.f32 0.0, %v988
    %v990 = vpop.f32.mrf.mxu0
    %991 = vmatprep.mubr.f32.mxu0 %v71
    %992 = vmatmul.mubr.f32.gmra.mxu0 %v70
    %v993 = vpop.f32.mrf.mxu0
    %v994 = vadd.f32 0.0, %v993
    %v995 = vpop.f32.mrf.mxu0
    %996 = vmatprep.mubr.f32.mxu0 %v73
    %997 = vmatmul.mubr.f32.gmra.mxu0 %v72
    %v998 = vpop.f32.mrf.mxu0
    %v999 = vadd.f32 0.0, %v998
    %v1000 = vpop.f32.mrf.mxu0
    %1001 = vmatprep.mubr.f32.mxu0 %v75
    %1002 = vmatmul.mubr.f32.gmra.mxu0 %v74
    %v1003 = vpop.f32.mrf.mxu0
    %v1004 = vadd.f32 0.0, %v1003
    %v1005 = vpop.f32.mrf.mxu0
    %1006 = vmatprep.mubr.f32.mxu0 %v77
    %1007 = vmatmul.mubr.f32.gmra.mxu0 %v76
    %v1008 = vpop.f32.mrf.mxu0
    %v1009 = vadd.f32 0.0, %v1008
    %v1010 = vpop.f32.mrf.mxu0
    %1011 = vmatprep.mubr.f32.mxu0 %v79
    %1012 = vmatmul.mubr.f32.gmra.mxu0 %v78
    %v1013 = vpop.f32.mrf.mxu0
    %v1014 = vadd.f32 0.0, %v1013
    %v1015 = vpop.f32.mrf.mxu0
    %1016 = vmatprep.mubr.f32.mxu0 %v81
    %1017 = vmatmul.mubr.f32.gmra.mxu0 %v80
    %v1018 = vpop.f32.mrf.mxu0
    %v1019 = vadd.f32 0.0, %v1018
    %v1020 = vpop.f32.mrf.mxu0
    %1021 = vmatprep.mubr.f32.mxu0 %v83
    %1022 = vmatmul.mubr.f32.gmra.mxu0 %v82
    %v1023 = vpop.f32.mrf.mxu0
    %v1024 = vadd.f32 0.0, %v1023
    %v1025 = vpop.f32.mrf.mxu0
    %1026 = vmatprep.mubr.f32.mxu0 %v85
    %1027 = vmatmul.mubr.f32.gmra.mxu0 %v84
    %v1028 = vpop.f32.mrf.mxu0
    %v1029 = vadd.f32 0.0, %v1028
    %v1030 = vpop.f32.mrf.mxu0
    %1031 = vmatprep.mubr.f32.mxu0 %v87
    %1032 = vmatmul.mubr.f32.gmra.mxu0 %v86
    %v1033 = vpop.f32.mrf.mxu0
    %v1034 = vadd.f32 0.0, %v1033
    %v1035 = vpop.f32.mrf.mxu0
    %1036 = vmatprep.mubr.f32.mxu0 %v89
    %1037 = vmatmul.mubr.f32.gmra.mxu0 %v88
    %v1038 = vpop.f32.mrf.mxu0
    %v1039 = vadd.f32 0.0, %v1038
    %v1040 = vpop.f32.mrf.mxu0
    %1041 = vmatprep.mubr.f32.mxu0 %v91
    %1042 = vmatmul.mubr.f32.gmra.mxu0 %v90
    %v1043 = vpop.f32.mrf.mxu0
    %v1044 = vadd.f32 0.0, %v1043
    %v1045 = vpop.f32.mrf.mxu0
    %1046 = vmatprep.mubr.f32.mxu0 %v93
    %1047 = vmatmul.mubr.f32.gmra.mxu0 %v92
    %v1048 = vpop.f32.mrf.mxu0
    %v1049 = vadd.f32 0.0, %v1048
    %v1050 = vpop.f32.mrf.mxu0
    %1051 = vmatprep.mubr.f32.mxu0 %v95
    %1052 = vmatmul.mubr.f32.gmra.mxu0 %v94
    %v1053 = vpop.f32.mrf.mxu0
    %v1054 = vadd.f32 0.0, %v1053
    %v1055 = vpop.f32.mrf.mxu0
    %1056 = vmatprep.mubr.f32.mxu0 %v97
    %1057 = vmatmul.mubr.f32.gmra.mxu0 %v96
    %v1058 = vpop.f32.mrf.mxu0
    %v1059 = vadd.f32 0.0, %v1058
    %v1060 = vpop.f32.mrf.mxu0
    %1061 = vmatprep.mubr.f32.mxu0 %v99
    %1062 = vmatmul.mubr.f32.gmra.mxu0 %v98
    %v1063 = vpop.f32.mrf.mxu0
    %v1064 = vadd.f32 0.0, %v1063
    %v1065 = vpop.f32.mrf.mxu0
    %1066 = vmatprep.mubr.f32.mxu0 %v101
    %1067 = vmatmul.mubr.f32.gmra.mxu0 %v100
    %v1068 = vpop.f32.mrf.mxu0
    %v1069 = vadd.f32 0.0, %v1068
    %v1070 = vpop.f32.mrf.mxu0
    %1071 = vmatprep.mubr.f32.mxu0 %v103
    %1072 = vmatmul.mubr.f32.gmra.mxu0 %v102
    %v1073 = vpop.f32.mrf.mxu0
    %v1074 = vadd.f32 0.0, %v1073
    %v1075 = vpop.f32.mrf.mxu0
    %1076 = vmatprep.mubr.f32.mxu0 %v105
    %1077 = vmatmul.mubr.f32.gmra.mxu0 %v104
    %v1078 = vpop.f32.mrf.mxu0
    %v1079 = vadd.f32 0.0, %v1078
    %v1080 = vpop.f32.mrf.mxu0
    %1081 = vmatprep.mubr.f32.mxu0 %v107
    %1082 = vmatmul.mubr.f32.gmra.mxu0 %v106
    %v1083 = vpop.f32.mrf.mxu0
    %v1084 = vadd.f32 0.0, %v1083
    %v1085 = vpop.f32.mrf.mxu0
    %1086 = vmatprep.mubr.f32.mxu0 %v109
    %1087 = vmatmul.mubr.f32.gmra.mxu0 %v108
    %v1088 = vpop.f32.mrf.mxu0
    %v1089 = vadd.f32 0.0, %v1088
    %v1090 = vpop.f32.mrf.mxu0
    %1091 = vmatprep.mubr.f32.mxu0 %v111
    %1092 = vmatmul.mubr.f32.gmra.mxu0 %v110
    %v1093 = vpop.f32.mrf.mxu0
    %v1094 = vadd.f32 0.0, %v1093
    %v1095 = vpop.f32.mrf.mxu0
    %1096 = vmatprep.mubr.f32.mxu0 %v113
    %1097 = vmatmul.mubr.f32.gmra.mxu0 %v112
    %v1098 = vpop.f32.mrf.mxu0
    %v1099 = vadd.f32 0.0, %v1098
    %v1100 = vpop.f32.mrf.mxu0
    %1101 = vmatprep.mubr.f32.mxu0 %v115
    %1102 = vmatmul.mubr.f32.gmra.mxu0 %v114
    %v1103 = vpop.f32.mrf.mxu0
    %v1104 = vadd.f32 0.0, %v1103
    %v1105 = vpop.f32.mrf.mxu0
    %1106 = vmatprep.mubr.f32.mxu0 %v117
    %1107 = vmatmul.mubr.f32.gmra.mxu0 %v116
    %v1108 = vpop.f32.mrf.mxu0
    %v1109 = vadd.f32 0.0, %v1108
    %v1110 = vpop.f32.mrf.mxu0
    %1111 = vmatprep.mubr.f32.mxu0 %v119
    %1112 = vmatmul.mubr.f32.gmra.mxu0 %v118
    %v1113 = vpop.f32.mrf.mxu0
    %v1114 = vadd.f32 0.0, %v1113
    %v1115 = vpop.f32.mrf.mxu0
    %1116 = vdwg.mxu0
    %v1117 = vmax.f32 %v959, 0.0
    %v1118 = vmax.f32 %v964, 0.0
    %v1119 = vmax.f32 %v969, 0.0
    %v1120 = vmax.f32 %v974, 0.0
    %v1121 = vmax.f32 %v979, 0.0
    %v1122 = vmax.f32 %v984, 0.0
    %v1123 = vmax.f32 %v989, 0.0
    %v1124 = vmax.f32 %v994, 0.0
    %v1125 = vmax.f32 %v999, 0.0
    %v1126 = vmax.f32 %v1004, 0.0
    %v1127 = vmax.f32 %v1009, 0.0
    %v1128 = vmax.f32 %v1014, 0.0
    %v1129 = vmax.f32 %v1019, 0.0
    %v1130 = vmax.f32 %v1024, 0.0
    %v1131 = vmax.f32 %v1029, 0.0
    %v1132 = vmax.f32 %v1034, 0.0
    %v1133 = vmax.f32 %v1039, 0.0
    %v1134 = vmax.f32 %v1044, 0.0
    %v1135 = vmax.f32 %v1049, 0.0
    %v1136 = vmax.f32 %v1054, 0.0
    %v1137 = vmax.f32 %v1059, 0.0
    %v1138 = vmax.f32 %v1064, 0.0
    %v1139 = vmax.f32 %v1069, 0.0
    %v1140 = vmax.f32 %v1074, 0.0
    %v1141 = vmax.f32 %v1079, 0.0
    %v1142 = vmax.f32 %v1084, 0.0
    %v1143 = vmax.f32 %v1089, 0.0
    %v1144 = vmax.f32 %v1094, 0.0
    %v1145 = vmax.f32 %v1099, 0.0
    %v1146 = vmax.f32 %v1104, 0.0
    %v1147 = vmax.f32 %v1109, 0.0
    %v1148 = vmax.f32 %v1114, 0.0
    %s1149 = scalar_lea.vmem [#allocation7], 256
    %v1150 = vld [vmem:[%s1149] sm:$0xff]
    %v1151 = vld [vmem:[%s1149 + $0x8] sm:$0xff]
    %v1152 = vld [vmem:[%s1149 + $0x10] sm:$0xff]
    %v1153 = vld [vmem:[%s1149 + $0x18] sm:$0xff]
    %v1154 = vld [vmem:[%s1149 + $0x20] sm:$0xff]
    %v1155 = vld [vmem:[%s1149 + $0x28] sm:$0xff]
    %v1156 = vld [vmem:[%s1149 + $0x30] sm:$0xff]
    %v1157 = vld [vmem:[%s1149 + $0x38] sm:$0xff]
    %v1158 = vld [vmem:[%s1149 + $0x40] sm:$0xff]
    %v1159 = vld [vmem:[%s1149 + $0x48] sm:$0xff]
    %v1160 = vld [vmem:[%s1149 + $0x50] sm:$0xff]
    %v1161 = vld [vmem:[%s1149 + $0x58] sm:$0xff]
    %v1162 = vld [vmem:[%s1149 + $0x60] sm:$0xff]
    %v1163 = vld [vmem:[%s1149 + $0x68] sm:$0xff]
    %v1164 = vld [vmem:[%s1149 + $0x70] sm:$0xff]
    %v1165 = vld [vmem:[%s1149 + $0x78] sm:$0xff]
    %1166 = vmatprep.subr.mxu0 0.0
    %1167 = vmatpush1.msra.mxu0 %v1165
    %1168 = vmatprep.subr.mxu0 0.0
    %1169 = vmatpush1.msra.mxu0 %v1164
    %1170 = vmatprep.subr.mxu0 0.0
    %1171 = vmatpush1.msra.mxu0 %v1163
    %1172 = vmatprep.subr.mxu0 0.0
    %1173 = vmatpush1.msra.mxu0 %v1162
    %1174 = vmatprep.subr.mxu0 0.0
    %1175 = vmatpush1.msra.mxu0 %v1161
    %1176 = vmatprep.subr.mxu0 0.0
    %1177 = vmatpush1.msra.mxu0 %v1160
    %1178 = vmatprep.subr.mxu0 0.0
    %1179 = vmatpush1.msra.mxu0 %v1159
    %1180 = vmatprep.subr.mxu0 0.0
    %1181 = vmatpush1.msra.mxu0 %v1158
    %1182 = vmatprep.subr.mxu0 0.0
    %1183 = vmatpush1.msra.mxu0 %v1157
    %1184 = vmatprep.subr.mxu0 0.0
    %1185 = vmatpush1.msra.mxu0 %v1156
    %1186 = vmatprep.subr.mxu0 0.0
    %1187 = vmatpush1.msra.mxu0 %v1155
    %1188 = vmatprep.subr.mxu0 0.0
    %1189 = vmatpush1.msra.mxu0 %v1154
    %1190 = vmatprep.subr.mxu0 0.0
    %1191 = vmatpush1.msra.mxu0 %v1153
    %1192 = vmatprep.subr.mxu0 0.0
    %1193 = vmatpush1.msra.mxu0 %v1152
    %1194 = vmatprep.subr.mxu0 0.0
    %1195 = vmatpush1.msra.mxu0 %v1151
    %1196 = vmatprep.subr.mxu0 0.0
    %1197 = vmatpush1.msra.mxu0 %v1150
    %1198 = vmatprep.subr.mxu0 0.0
    %1199 = vmatpush2.msra.mxu0 0.0
    %1200 = vmatprep.subr.mxu0 0.0
    %1201 = vmatpush2.msra.mxu0 0.0
    %1202 = vmatprep.subr.mxu0 0.0
    %1203 = vmatpush2.msra.mxu0 0.0
    %1204 = vmatprep.subr.mxu0 0.0
    %1205 = vmatpush2.msra.mxu0 0.0
    %1206 = vmatprep.subr.mxu0 0.0
    %1207 = vmatpush2.msra.mxu0 0.0
    %1208 = vmatprep.subr.mxu0 0.0
    %1209 = vmatpush2.msra.mxu0 0.0
    %1210 = vmatprep.subr.mxu0 0.0
    %1211 = vmatpush2.msra.mxu0 0.0
    %1212 = vmatprep.subr.mxu0 0.0
    %1213 = vmatpush2.msra.mxu0 0.0
    %1214 = vmatprep.subr.mxu0 0.0
    %1215 = vmatpush2.msra.mxu0 0.0
    %1216 = vmatprep.subr.mxu0 0.0
    %1217 = vmatpush2.msra.mxu0 0.0
    %1218 = vmatprep.subr.mxu0 0.0
    %1219 = vmatpush2.msra.mxu0 0.0
    %1220 = vmatprep.subr.mxu0 0.0
    %1221 = vmatpush2.msra.mxu0 0.0
    %1222 = vmatprep.subr.mxu0 0.0
    %1223 = vmatpush2.msra.mxu0 0.0
    %1224 = vmatprep.subr.mxu0 0.0
    %1225 = vmatpush2.msra.mxu0 0.0
    %1226 = vmatprep.subr.mxu0 0.0
    %1227 = vmatpush2.msra.mxu0 0.0
    %1228 = vmatprep.subr.mxu0 0.0
    %1229 = vmatpush2.msra.mxu0 0.0
    %1230 = vmatprep.mubr.f32.mxu0 0.0
    %1231 = vmatmul.mubr.f32.gmra.mxu0 %v1117
    %v1232 = vpop.f32.mrf.mxu0
    %v1233 = vadd.f32 0.0, %v1232
    %v1234 = vpop.f32.mrf.mxu0
    %1235 = vmatprep.mubr.f32.mxu0 0.0
    %1236 = vmatmul.mubr.f32.gmra.mxu0 %v1118
    %v1237 = vpop.f32.mrf.mxu0
    %v1238 = vadd.f32 0.0, %v1237
    %v1239 = vpop.f32.mrf.mxu0
    %1240 = vmatprep.mubr.f32.mxu0 0.0
    %1241 = vmatmul.mubr.f32.gmra.mxu0 %v1119
    %v1242 = vpop.f32.mrf.mxu0
    %v1243 = vadd.f32 0.0, %v1242
    %v1244 = vpop.f32.mrf.mxu0
    %1245 = vmatprep.mubr.f32.mxu0 0.0
    %1246 = vmatmul.mubr.f32.gmra.mxu0 %v1120
    %v1247 = vpop.f32.mrf.mxu0
    %v1248 = vadd.f32 0.0, %v1247
    %v1249 = vpop.f32.mrf.mxu0
    %1250 = vmatprep.mubr.f32.mxu0 0.0
    %1251 = vmatmul.mubr.f32.gmra.mxu0 %v1121
    %v1252 = vpop.f32.mrf.mxu0
    %v1253 = vadd.f32 0.0, %v1252
    %v1254 = vpop.f32.mrf.mxu0
    %1255 = vmatprep.mubr.f32.mxu0 0.0
    %1256 = vmatmul.mubr.f32.gmra.mxu0 %v1122
    %v1257 = vpop.f32.mrf.mxu0
    %v1258 = vadd.f32 0.0, %v1257
    %v1259 = vpop.f32.mrf.mxu0
    %1260 = vmatprep.mubr.f32.mxu0 0.0
    %1261 = vmatmul.mubr.f32.gmra.mxu0 %v1123
    %v1262 = vpop.f32.mrf.mxu0
    %v1263 = vadd.f32 0.0, %v1262
    %v1264 = vpop.f32.mrf.mxu0
    %1265 = vmatprep.mubr.f32.mxu0 0.0
    %1266 = vmatmul.mubr.f32.gmra.mxu0 %v1124
    %v1267 = vpop.f32.mrf.mxu0
    %v1268 = vadd.f32 0.0, %v1267
    %v1269 = vpop.f32.mrf.mxu0
    %1270 = vmatprep.mubr.f32.mxu0 0.0
    %1271 = vmatmul.mubr.f32.gmra.mxu0 %v1125
    %v1272 = vpop.f32.mrf.mxu0
    %v1273 = vadd.f32 0.0, %v1272
    %v1274 = vpop.f32.mrf.mxu0
    %1275 = vmatprep.mubr.f32.mxu0 0.0
    %1276 = vmatmul.mubr.f32.gmra.mxu0 %v1126
    %v1277 = vpop.f32.mrf.mxu0
    %v1278 = vadd.f32 0.0, %v1277
    %v1279 = vpop.f32.mrf.mxu0
    %1280 = vmatprep.mubr.f32.mxu0 0.0
    %1281 = vmatmul.mubr.f32.gmra.mxu0 %v1127
    %v1282 = vpop.f32.mrf.mxu0
    %v1283 = vadd.f32 0.0, %v1282
    %v1284 = vpop.f32.mrf.mxu0
    %1285 = vmatprep.mubr.f32.mxu0 0.0
    %1286 = vmatmul.mubr.f32.gmra.mxu0 %v1128
    %v1287 = vpop.f32.mrf.mxu0
    %v1288 = vadd.f32 0.0, %v1287
    %v1289 = vpop.f32.mrf.mxu0
    %1290 = vmatprep.mubr.f32.mxu0 0.0
    %1291 = vmatmul.mubr.f32.gmra.mxu0 %v1129
    %v1292 = vpop.f32.mrf.mxu0
    %v1293 = vadd.f32 0.0, %v1292
    %v1294 = vpop.f32.mrf.mxu0
    %1295 = vmatprep.mubr.f32.mxu0 0.0
    %1296 = vmatmul.mubr.f32.gmra.mxu0 %v1130
    %v1297 = vpop.f32.mrf.mxu0
    %v1298 = vadd.f32 0.0, %v1297
    %v1299 = vpop.f32.mrf.mxu0
    %1300 = vmatprep.mubr.f32.mxu0 0.0
    %1301 = vmatmul.mubr.f32.gmra.mxu0 %v1131
    %v1302 = vpop.f32.mrf.mxu0
    %v1303 = vadd.f32 0.0, %v1302
    %v1304 = vpop.f32.mrf.mxu0
    %1305 = vmatprep.mubr.f32.mxu0 0.0
    %1306 = vmatmul.mubr.f32.gmra.mxu0 %v1132
    %v1307 = vpop.f32.mrf.mxu0
    %v1308 = vadd.f32 0.0, %v1307
    %v1309 = vpop.f32.mrf.mxu0
    %1310 = vmatprep.mubr.f32.mxu0 0.0
    %1311 = vmatmul.mubr.f32.gmra.mxu0 %v1133
    %v1312 = vpop.f32.mrf.mxu0
    %v1313 = vadd.f32 0.0, %v1312
    %v1314 = vpop.f32.mrf.mxu0
    %1315 = vmatprep.mubr.f32.mxu0 0.0
    %1316 = vmatmul.mubr.f32.gmra.mxu0 %v1134
    %v1317 = vpop.f32.mrf.mxu0
    %v1318 = vadd.f32 0.0, %v1317
    %v1319 = vpop.f32.mrf.mxu0
    %1320 = vmatprep.mubr.f32.mxu0 0.0
    %1321 = vmatmul.mubr.f32.gmra.mxu0 %v1135
    %v1322 = vpop.f32.mrf.mxu0
    %v1323 = vadd.f32 0.0, %v1322
    %v1324 = vpop.f32.mrf.mxu0
    %1325 = vmatprep.mubr.f32.mxu0 0.0
    %1326 = vmatmul.mubr.f32.gmra.mxu0 %v1136
    %v1327 = vpop.f32.mrf.mxu0
    %v1328 = vadd.f32 0.0, %v1327
    %v1329 = vpop.f32.mrf.mxu0
    %1330 = vmatprep.mubr.f32.mxu0 0.0
    %1331 = vmatmul.mubr.f32.gmra.mxu0 %v1137
    %v1332 = vpop.f32.mrf.mxu0
    %v1333 = vadd.f32 0.0, %v1332
    %v1334 = vpop.f32.mrf.mxu0
    %1335 = vmatprep.mubr.f32.mxu0 0.0
    %1336 = vmatmul.mubr.f32.gmra.mxu0 %v1138
    %v1337 = vpop.f32.mrf.mxu0
    %v1338 = vadd.f32 0.0, %v1337
    %v1339 = vpop.f32.mrf.mxu0
    %1340 = vmatprep.mubr.f32.mxu0 0.0
    %1341 = vmatmul.mubr.f32.gmra.mxu0 %v1139
    %v1342 = vpop.f32.mrf.mxu0
    %v1343 = vadd.f32 0.0, %v1342
    %v1344 = vpop.f32.mrf.mxu0
    %1345 = vmatprep.mubr.f32.mxu0 0.0
    %1346 = vmatmul.mubr.f32.gmra.mxu0 %v1140
    %v1347 = vpop.f32.mrf.mxu0
    %v1348 = vadd.f32 0.0, %v1347
    %v1349 = vpop.f32.mrf.mxu0
    %1350 = vmatprep.mubr.f32.mxu0 0.0
    %1351 = vmatmul.mubr.f32.gmra.mxu0 %v1141
    %v1352 = vpop.f32.mrf.mxu0
    %v1353 = vadd.f32 0.0, %v1352
    %v1354 = vpop.f32.mrf.mxu0
    %1355 = vmatprep.mubr.f32.mxu0 0.0
    %1356 = vmatmul.mubr.f32.gmra.mxu0 %v1142
    %v1357 = vpop.f32.mrf.mxu0
    %v1358 = vadd.f32 0.0, %v1357
    %v1359 = vpop.f32.mrf.mxu0
    %1360 = vmatprep.mubr.f32.mxu0 0.0
    %1361 = vmatmul.mubr.f32.gmra.mxu0 %v1143
    %v1362 = vpop.f32.mrf.mxu0
    %v1363 = vadd.f32 0.0, %v1362
    %v1364 = vpop.f32.mrf.mxu0
    %1365 = vmatprep.mubr.f32.mxu0 0.0
    %1366 = vmatmul.mubr.f32.gmra.mxu0 %v1144
    %v1367 = vpop.f32.mrf.mxu0
    %v1368 = vadd.f32 0.0, %v1367
    %v1369 = vpop.f32.mrf.mxu0
    %1370 = vmatprep.mubr.f32.mxu0 0.0
    %1371 = vmatmul.mubr.f32.gmra.mxu0 %v1145
    %v1372 = vpop.f32.mrf.mxu0
    %v1373 = vadd.f32 0.0, %v1372
    %v1374 = vpop.f32.mrf.mxu0
    %1375 = vmatprep.mubr.f32.mxu0 0.0
    %1376 = vmatmul.mubr.f32.gmra.mxu0 %v1146
    %v1377 = vpop.f32.mrf.mxu0
    %v1378 = vadd.f32 0.0, %v1377
    %v1379 = vpop.f32.mrf.mxu0
    %1380 = vmatprep.mubr.f32.mxu0 0.0
    %1381 = vmatmul.mubr.f32.gmra.mxu0 %v1147
    %v1382 = vpop.f32.mrf.mxu0
    %v1383 = vadd.f32 0.0, %v1382
    %v1384 = vpop.f32.mrf.mxu0
    %1385 = vmatprep.mubr.f32.mxu0 0.0
    %1386 = vmatmul.mubr.f32.gmra.mxu0 %v1148
    %v1387 = vpop.f32.mrf.mxu0
    %v1388 = vadd.f32 0.0, %v1387
    %v1389 = vpop.f32.mrf.mxu0
    %1390 = vdwg.mxu0
    %1391 = vmatprep.subr.mxu0 0.0
    %1392 = vmatpush1.msra.mxu0 %v1308
    %1393 = vmatprep.subr.mxu0 0.0
    %1394 = vmatpush1.msra.mxu0 %v1303
    %1395 = vmatprep.subr.mxu0 0.0
    %1396 = vmatpush1.msra.mxu0 %v1298
    %1397 = vmatprep.subr.mxu0 0.0
    %1398 = vmatpush1.msra.mxu0 %v1293
    %1399 = vmatprep.subr.mxu0 0.0
    %1400 = vmatpush1.msra.mxu0 %v1288
    %1401 = vmatprep.subr.mxu0 0.0
    %1402 = vmatpush1.msra.mxu0 %v1283
    %1403 = vmatprep.subr.mxu0 0.0
    %1404 = vmatpush1.msra.mxu0 %v1278
    %1405 = vmatprep.subr.mxu0 0.0
    %1406 = vmatpush1.msra.mxu0 %v1273
    %1407 = vmatprep.subr.mxu0 0.0
    %1408 = vmatpush1.msra.mxu0 %v1268
    %1409 = vmatprep.subr.mxu0 0.0
    %1410 = vmatpush1.msra.mxu0 %v1263
    %1411 = vmatprep.subr.mxu0 0.0
    %1412 = vmatpush1.msra.mxu0 %v1258
    %1413 = vmatprep.subr.mxu0 0.0
    %1414 = vmatpush1.msra.mxu0 %v1253
    %1415 = vmatprep.subr.mxu0 0.0
    %1416 = vmatpush1.msra.mxu0 %v1248
    %1417 = vmatprep.subr.mxu0 0.0
    %1418 = vmatpush1.msra.mxu0 %v1243
    %1419 = vmatprep.subr.mxu0 0.0
    %1420 = vmatpush1.msra.mxu0 %v1238
    %1421 = vmatprep.subr.mxu0 0.0
    %1422 = vmatpush1.msra.mxu0 %v1233
    %1423 = vmatprep.subr.mxu0 0.0
    %1424 = vmatpush2.msra.mxu0 %v1388
    %1425 = vmatprep.subr.mxu0 0.0
    %1426 = vmatpush2.msra.mxu0 %v1383
    %1427 = vmatprep.subr.mxu0 0.0
    %1428 = vmatpush2.msra.mxu0 %v1378
    %1429 = vmatprep.subr.mxu0 0.0
    %1430 = vmatpush2.msra.mxu0 %v1373
    %1431 = vmatprep.subr.mxu0 0.0
    %1432 = vmatpush2.msra.mxu0 %v1368
    %1433 = vmatprep.subr.mxu0 0.0
    %1434 = vmatpush2.msra.mxu0 %v1363
    %1435 = vmatprep.subr.mxu0 0.0
    %1436 = vmatpush2.msra.mxu0 %v1358
    %1437 = vmatprep.subr.mxu0 0.0
    %1438 = vmatpush2.msra.mxu0 %v1353
    %1439 = vmatprep.subr.mxu0 0.0
    %1440 = vmatpush2.msra.mxu0 %v1348
    %1441 = vmatprep.subr.mxu0 0.0
    %1442 = vmatpush2.msra.mxu0 %v1343
    %1443 = vmatprep.subr.mxu0 0.0
    %1444 = vmatpush2.msra.mxu0 %v1338
    %1445 = vmatprep.subr.mxu0 0.0
    %1446 = vmatpush2.msra.mxu0 %v1333
    %1447 = vmatprep.subr.mxu0 0.0
    %1448 = vmatpush2.msra.mxu0 %v1328
    %1449 = vmatprep.subr.mxu0 0.0
    %1450 = vmatpush2.msra.mxu0 %v1323
    %1451 = vmatprep.subr.mxu0 0.0
    %1452 = vmatpush2.msra.mxu0 %v1318
    %1453 = vmatprep.subr.mxu0 0.0
    %1454 = vmatpush2.msra.mxu0 %v1313
    %1455 = vmatprep.mubr.f32.mxu0 %v57
    %1456 = vmatmul.mubr.f32.gmra.mxu0 %v56
    %v1457 = vpop.f32.mrf.mxu0
    %v1458 = vadd.f32 0.0, %v1457
    %v1459 = vpop.f32.mrf.mxu0
    %1460 = vmatprep.mubr.f32.mxu0 %v59
    %1461 = vmatmul.mubr.f32.gmra.mxu0 %v58
    %v1462 = vpop.f32.mrf.mxu0
    %v1463 = vadd.f32 0.0, %v1462
    %v1464 = vpop.f32.mrf.mxu0
    %1465 = vmatprep.mubr.f32.mxu0 %v61
    %1466 = vmatmul.mubr.f32.gmra.mxu0 %v60
    %v1467 = vpop.f32.mrf.mxu0
    %v1468 = vadd.f32 0.0, %v1467
    %v1469 = vpop.f32.mrf.mxu0
    %1470 = vmatprep.mubr.f32.mxu0 %v63
    %1471 = vmatmul.mubr.f32.gmra.mxu0 %v62
    %v1472 = vpop.f32.mrf.mxu0
    %v1473 = vadd.f32 0.0, %v1472
    %v1474 = vpop.f32.mrf.mxu0
    %1475 = vmatprep.mubr.f32.mxu0 %v65
    %1476 = vmatmul.mubr.f32.gmra.mxu0 %v64
    %v1477 = vpop.f32.mrf.mxu0
    %v1478 = vadd.f32 0.0, %v1477
    %v1479 = vpop.f32.mrf.mxu0
    %1480 = vmatprep.mubr.f32.mxu0 %v67
    %1481 = vmatmul.mubr.f32.gmra.mxu0 %v66
    %v1482 = vpop.f32.mrf.mxu0
    %v1483 = vadd.f32 0.0, %v1482
    %v1484 = vpop.f32.mrf.mxu0
    %1485 = vmatprep.mubr.f32.mxu0 %v69
    %1486 = vmatmul.mubr.f32.gmra.mxu0 %v68
    %v1487 = vpop.f32.mrf.mxu0
    %v1488 = vadd.f32 0.0, %v1487
    %v1489 = vpop.f32.mrf.mxu0
    %1490 = vmatprep.mubr.f32.mxu0 %v71
    %1491 = vmatmul.mubr.f32.gmra.mxu0 %v70
    %v1492 = vpop.f32.mrf.mxu0
    %v1493 = vadd.f32 0.0, %v1492
    %v1494 = vpop.f32.mrf.mxu0
    %1495 = vmatprep.mubr.f32.mxu0 %v73
    %1496 = vmatmul.mubr.f32.gmra.mxu0 %v72
    %v1497 = vpop.f32.mrf.mxu0
    %v1498 = vadd.f32 0.0, %v1497
    %v1499 = vpop.f32.mrf.mxu0
    %1500 = vmatprep.mubr.f32.mxu0 %v75
    %1501 = vmatmul.mubr.f32.gmra.mxu0 %v74
    %v1502 = vpop.f32.mrf.mxu0
    %v1503 = vadd.f32 0.0, %v1502
    %v1504 = vpop.f32.mrf.mxu0
    %1505 = vmatprep.mubr.f32.mxu0 %v77
    %1506 = vmatmul.mubr.f32.gmra.mxu0 %v76
    %v1507 = vpop.f32.mrf.mxu0
    %v1508 = vadd.f32 0.0, %v1507
    %v1509 = vpop.f32.mrf.mxu0
    %1510 = vmatprep.mubr.f32.mxu0 %v79
    %1511 = vmatmul.mubr.f32.gmra.mxu0 %v78
    %v1512 = vpop.f32.mrf.mxu0
    %v1513 = vadd.f32 0.0, %v1512
    %v1514 = vpop.f32.mrf.mxu0
    %1515 = vmatprep.mubr.f32.mxu0 %v81
    %1516 = vmatmul.mubr.f32.gmra.mxu0 %v80
    %v1517 = vpop.f32.mrf.mxu0
    %v1518 = vadd.f32 0.0, %v1517
    %v1519 = vpop.f32.mrf.mxu0
    %1520 = vmatprep.mubr.f32.mxu0 %v83
    %1521 = vmatmul.mubr.f32.gmra.mxu0 %v82
    %v1522 = vpop.f32.mrf.mxu0
    %v1523 = vadd.f32 0.0, %v1522
    %v1524 = vpop.f32.mrf.mxu0
    %1525 = vmatprep.mubr.f32.mxu0 %v85
    %1526 = vmatmul.mubr.f32.gmra.mxu0 %v84
    %v1527 = vpop.f32.mrf.mxu0
    %v1528 = vadd.f32 0.0, %v1527
    %v1529 = vpop.f32.mrf.mxu0
    %1530 = vmatprep.mubr.f32.mxu0 %v87
    %1531 = vmatmul.mubr.f32.gmra.mxu0 %v86
    %v1532 = vpop.f32.mrf.mxu0
    %v1533 = vadd.f32 0.0, %v1532
    %v1534 = vpop.f32.mrf.mxu0
    %1535 = vmatprep.mubr.f32.mxu0 %v89
    %1536 = vmatmul.mubr.f32.gmra.mxu0 %v88
    %v1537 = vpop.f32.mrf.mxu0
    %v1538 = vadd.f32 0.0, %v1537
    %v1539 = vpop.f32.mrf.mxu0
    %1540 = vmatprep.mubr.f32.mxu0 %v91
    %1541 = vmatmul.mubr.f32.gmra.mxu0 %v90
    %v1542 = vpop.f32.mrf.mxu0
    %v1543 = vadd.f32 0.0, %v1542
    %v1544 = vpop.f32.mrf.mxu0
    %1545 = vmatprep.mubr.f32.mxu0 %v93
    %1546 = vmatmul.mubr.f32.gmra.mxu0 %v92
    %v1547 = vpop.f32.mrf.mxu0
    %v1548 = vadd.f32 0.0, %v1547
    %v1549 = vpop.f32.mrf.mxu0
    %1550 = vmatprep.mubr.f32.mxu0 %v95
    %1551 = vmatmul.mubr.f32.gmra.mxu0 %v94
    %v1552 = vpop.f32.mrf.mxu0
    %v1553 = vadd.f32 0.0, %v1552
    %v1554 = vpop.f32.mrf.mxu0
    %1555 = vmatprep.mubr.f32.mxu0 %v97
    %1556 = vmatmul.mubr.f32.gmra.mxu0 %v96
    %v1557 = vpop.f32.mrf.mxu0
    %v1558 = vadd.f32 0.0, %v1557
    %v1559 = vpop.f32.mrf.mxu0
    %1560 = vmatprep.mubr.f32.mxu0 %v99
    %1561 = vmatmul.mubr.f32.gmra.mxu0 %v98
    %v1562 = vpop.f32.mrf.mxu0
    %v1563 = vadd.f32 0.0, %v1562
    %v1564 = vpop.f32.mrf.mxu0
    %1565 = vmatprep.mubr.f32.mxu0 %v101
    %1566 = vmatmul.mubr.f32.gmra.mxu0 %v100
    %v1567 = vpop.f32.mrf.mxu0
    %v1568 = vadd.f32 0.0, %v1567
    %v1569 = vpop.f32.mrf.mxu0
    %1570 = vmatprep.mubr.f32.mxu0 %v103
    %1571 = vmatmul.mubr.f32.gmra.mxu0 %v102
    %v1572 = vpop.f32.mrf.mxu0
    %v1573 = vadd.f32 0.0, %v1572
    %v1574 = vpop.f32.mrf.mxu0
    %1575 = vmatprep.mubr.f32.mxu0 %v105
    %1576 = vmatmul.mubr.f32.gmra.mxu0 %v104
    %v1577 = vpop.f32.mrf.mxu0
    %v1578 = vadd.f32 0.0, %v1577
    %v1579 = vpop.f32.mrf.mxu0
    %1580 = vmatprep.mubr.f32.mxu0 %v107
    %1581 = vmatmul.mubr.f32.gmra.mxu0 %v106
    %v1582 = vpop.f32.mrf.mxu0
    %v1583 = vadd.f32 0.0, %v1582
    %v1584 = vpop.f32.mrf.mxu0
    %1585 = vmatprep.mubr.f32.mxu0 %v109
    %1586 = vmatmul.mubr.f32.gmra.mxu0 %v108
    %v1587 = vpop.f32.mrf.mxu0
    %v1588 = vadd.f32 0.0, %v1587
    %v1589 = vpop.f32.mrf.mxu0
    %1590 = vmatprep.mubr.f32.mxu0 %v111
    %1591 = vmatmul.mubr.f32.gmra.mxu0 %v110
    %v1592 = vpop.f32.mrf.mxu0
    %v1593 = vadd.f32 0.0, %v1592
    %v1594 = vpop.f32.mrf.mxu0
    %1595 = vmatprep.mubr.f32.mxu0 %v113
    %1596 = vmatmul.mubr.f32.gmra.mxu0 %v112
    %v1597 = vpop.f32.mrf.mxu0
    %v1598 = vadd.f32 0.0, %v1597
    %v1599 = vpop.f32.mrf.mxu0
    %1600 = vmatprep.mubr.f32.mxu0 %v115
    %1601 = vmatmul.mubr.f32.gmra.mxu0 %v114
    %v1602 = vpop.f32.mrf.mxu0
    %v1603 = vadd.f32 0.0, %v1602
    %v1604 = vpop.f32.mrf.mxu0
    %1605 = vmatprep.mubr.f32.mxu0 %v117
    %1606 = vmatmul.mubr.f32.gmra.mxu0 %v116
    %v1607 = vpop.f32.mrf.mxu0
    %v1608 = vadd.f32 0.0, %v1607
    %v1609 = vpop.f32.mrf.mxu0
    %1610 = vmatprep.mubr.f32.mxu0 %v119
    %1611 = vmatmul.mubr.f32.gmra.mxu0 %v118
    %v1612 = vpop.f32.mrf.mxu0
    %v1613 = vadd.f32 0.0, %v1612
    %v1614 = vpop.f32.mrf.mxu0
    %1615 = vdwg.mxu0
    %1616 = vst [vmem:[#allocation8] sm:$0xff] %v1458
    %1617 = vst [vmem:[#allocation8 + $0x8] sm:$0xff] %v1463
    %1618 = vst [vmem:[#allocation8 + $0x10] sm:$0xff] %v1468
    %1619 = vst [vmem:[#allocation8 + $0x18] sm:$0xff] %v1473
    %1620 = vst [vmem:[#allocation8 + $0x20] sm:$0xff] %v1478
    %1621 = vst [vmem:[#allocation8 + $0x28] sm:$0xff] %v1483
    %1622 = vst [vmem:[#allocation8 + $0x30] sm:$0xff] %v1488
    %1623 = vst [vmem:[#allocation8 + $0x38] sm:$0xff] %v1493
    %1624 = vst [vmem:[#allocation8 + $0x40] sm:$0xff] %v1498
    %1625 = vst [vmem:[#allocation8 + $0x48] sm:$0xff] %v1503
    %1626 = vst [vmem:[#allocation8 + $0x50] sm:$0xff] %v1508
    %1627 = vst [vmem:[#allocation8 + $0x58] sm:$0xff] %v1513
    %1628 = vst [vmem:[#allocation8 + $0x60] sm:$0xff] %v1518
    %1629 = vst [vmem:[#allocation8 + $0x68] sm:$0xff] %v1523
    %1630 = vst [vmem:[#allocation8 + $0x70] sm:$0xff] %v1528
    %1631 = vst [vmem:[#allocation8 + $0x78] sm:$0xff] %v1533
    %1632 = vst [vmem:[#allocation8 + $0x80] sm:$0xff] %v1538
    %1633 = vst [vmem:[#allocation8 + $0x88] sm:$0xff] %v1543
    %1634 = vst [vmem:[#allocation8 + $0x90] sm:$0xff] %v1548
    %1635 = vst [vmem:[#allocation8 + $0x98] sm:$0xff] %v1553
    %1636 = vst [vmem:[#allocation8 + $0xa0] sm:$0xff] %v1558
    %1637 = vst [vmem:[#allocation8 + $0xa8] sm:$0xff] %v1563
    %1638 = vst [vmem:[#allocation8 + $0xb0] sm:$0xff] %v1568
    %1639 = vst [vmem:[#allocation8 + $0xb8] sm:$0xff] %v1573
    %1640 = vst [vmem:[#allocation8 + $0xc0] sm:$0xff] %v1578
    %1641 = vst [vmem:[#allocation8 + $0xc8] sm:$0xff] %v1583
    %1642 = vst [vmem:[#allocation8 + $0xd0] sm:$0xff] %v1588
    %1643 = vst [vmem:[#allocation8 + $0xd8] sm:$0xff] %v1593
    %1644 = vst [vmem:[#allocation8 + $0xe0] sm:$0xff] %v1598
    %1645 = vst [vmem:[#allocation8 + $0xe8] sm:$0xff] %v1603
    %1646 = vst [vmem:[#allocation8 + $0xf0] sm:$0xff] %v1608
    %1647 = vst [vmem:[#allocation8 + $0xf8] sm:$0xff] %v1613
    // Predicated region
    $region26: #{tpu_custom_call.1} parent=1 // pred_check
      _
    $region27: #{tpu_custom_call.1} parent=1 // pred_check_branch
      %1649 = sbr.rel (0) target = $region29
    $region28: #{tpu_custom_call.1} parent=1 // pred_region
      %s1651 = ssub.s32 4096, 4096
      %1652 = vsyncadd [#allocation4], %s1651
      %s1653 = sshll.u32 [#allocation8], 4
      %s1654 = int_to_ptr.vmem [resolvable:$true] %s1653
      %1659 = dma.vmem_to_hbm [thread:$0]  %s1654, 4096, %s3, [#allocation4], 128, 128, 8
    $region29: #{tpu_custom_call.1} parent=1 // pred_fallthru
      _
    // Predicated region
    $region30: #{tpu_custom_call.1} parent=1 // pred_check
      _
    $region31: #{tpu_custom_call.1} parent=1 // pred_check_branch
      %1661 = sbr.rel (0) target = $region33
    $region32: #{tpu_custom_call.1} parent=1 // pred_region
      %1662 = dma.done [#allocation4], 4096
    $region33: #{tpu_custom_call.1} parent=1 // pred_fallthru
      _
    %1663 = vsyncpa [#allocation3], 1
    %1664 = vsyncpa [#allocation6], 1
    %1665 = vsyncpa [#allocation4], 1

</llo_original>
